<compile_context>
chip_gen: v7x
topology: tpu7x:2x2x1
jax: 0.10.0
libtpu: 0.0.40
codegen_flags: <defaults>
</compile_context>

<pallas_src>
import functools

import jax
import jax.numpy as jnp
from jax.experimental import pallas as pl
from jax.experimental.pallas import tpu as pltpu


# ----------------------------- Pallas kernel --------------------------------
def graphsnn_kernel(a_ref, x_ref, d_ref, msk_ref, eps_ref,
                    w1_ref, b1_ref, w2_ref, b2_ref,
                    wox_ref, woh1_ref, woh2_ref, bo_ref,
                    out_ref):
    """One grid step = TB graphs packed block-diagonally.

    a_ref  : (1, M, M)  bf16  block-diagonal adjacency, M = TB * N_pad
    x_ref  : (1, M, F)  bf16  node features, graphs stacked along rows
    d_ref  : (1, M, 1)  f32   diag(A) per node
    msk_ref: (1, M, 1)  f32   1.0 for rows < N_nodes_max (node-sum mask)
    eps_ref: (2,)       f32   SMEM scalars (eps of conv layer 1 / 2)
    w1,w2  : bf16 conv weights; b1,b2: f32 biases
    wox/woh1/woh2/bo: lane-padded (128-wide) readout projection / bias (f32)
    out_ref: (1, TB, 128) f32 log-softmax (first C lanes valid)
    """
    tb = out_ref.shape[1]
    m_rows = a_ref.shape[1]
    n_pad = m_rows // tb

    A = a_ref[0]                       # (M, M) bf16 block-diagonal
    Xb = x_ref[0]                      # (M, F) bf16
    d = d_ref[0]                       # (M, 1) f32
    msk = msk_ref[0]                   # (M, 1) f32
    eps1 = eps_ref[0]
    eps2 = eps_ref[1]

    Xf = Xb.astype(jnp.float32)        # (M, F) f32 (used for correction/readout)

    def conv(hb, hf, eps, w_ref, b_ref):
        # A_mod @ H = A @ H + (eps - 1) * diag(A) * H   (correction in f32)
        ah = (jnp.dot(A, hb, preferred_element_type=jnp.float32)
              + (eps - 1.0) * d * hf)                            # (M, K) f32
        z = jnp.dot(ah.astype(jnp.bfloat16), w_ref[...],
                    preferred_element_type=jnp.float32) + b_ref[...]
        return jnp.maximum(z, 0.0)     # ReLU; dropout p=0 -> identity

    h1 = conv(Xb, Xf, eps1, w1_ref, b1_ref)                       # (M, H) f32
    h2 = conv(h1.astype(jnp.bfloat16), h1, eps2, w2_ref, b2_ref)  # (M, H) f32

    # readout: per-node projection (tall matmuls), masked node-sum, log_softmax
    proj = (jnp.dot(Xf, wox_ref[...], preferred_element_type=jnp.float32)
            + jnp.dot(h1, woh1_ref[...], preferred_element_type=jnp.float32)
            + jnp.dot(h2, woh2_ref[...], preferred_element_type=jnp.float32))
    proj = proj * msk                   # drop rows from the 8-alignment padding
    logits = jnp.sum(proj.reshape(tb, n_pad, proj.shape[-1]), axis=1) + bo_ref[...]

    mx = jnp.max(logits, axis=-1, keepdims=True)
    z = logits - mx
    lse = jnp.log(jnp.sum(jnp.exp(z), axis=-1, keepdims=True))
    out_ref[0] = z - lse                # (TB, 128) lane-dense log_softmax


# ------------------------------- wrapper -------------------------------------
def _round_up(x, m):
    return ((x + m - 1) // m) * m


def _choose_tb(batch, n_pad, f, h, c_pad, vmem_budget, target_rows=256):
    """Largest TB (<= batch) whose per-step VMEM footprint fits the budget."""
    tb = max(1, min(batch, max(1, target_rows // n_pad)))

    def vmem_bytes(t):
        m = t * n_pad
        blocks = 2 * (m * m * 2 + m * f * 2 + 2 * m * 4)   # A_bd, X, d, mask (x2 bufs)
        weights = 2 * ((f * h + h * h) * 2 + 2 * h * 4
                       + (f + 2 * h + 1) * c_pad * 4)
        out = 2 * t * c_pad * 4
        live = m * (f + 3 * h + 2 * c_pad) * 4              # f32 intermediates (rough)
        return blocks + weights + out + live

    while tb > 1 and vmem_bytes(tb) > vmem_budget:
        tb -= 1
    return tb


@functools.partial(jax.jit, static_argnames=("tb",))
def graphsnn_forward(A, X, params, *, tb=None):
    """A: (B, N, N), X: (B, N, F) -> log-softmax logits (B, C) f32."""
    B, N, F = X.shape
    H = params["W1"].shape[1]
    C = params["bo"].shape[1]
    C_pad = max(128, _round_up(C, 128))     # lane-dense class slab
    N_pad = _round_up(N, 8)                 # sublane-aligned node dim

    if tb is None:
        tb = _choose_tb(B, N_pad, F, H, C_pad, vmem_budget=40 * 1024 * 1024)
    nb = pl.cdiv(B, tb)
    b_pad = nb * tb
    M = tb * N_pad

    # ---- node / batch zero-padding; bf16 MXU operands ----------------------
    A_bf = A.astype(jnp.bfloat16)
    X_bf = X.astype(jnp.bfloat16)
    if N_pad != N:
        A_bf = jnp.pad(A_bf, ((0, 0), (0, N_pad - N), (0, N_pad - N)))
        X_bf = jnp.pad(X_bf, ((0, 0), (0, N_pad - N), (0, 0)))
    if b_pad != B:
        A_bf = jnp.pad(A_bf, ((0, b_pad - B), (0, 0), (0, 0)))
        X_bf = jnp.pad(X_bf, ((0, b_pad - B), (0, 0), (0, 0)))

    # ---- block-diagonal adjacency (one per grid step, shared by both layers)
    A_r = A_bf.reshape(nb, tb, N_pad, N_pad)
    eye_tb = jnp.eye(tb, dtype=jnp.bfloat16)
    A_bd = (A_r[:, :, :, None, :] * eye_tb[None, :, None, :, None]
            ).reshape(nb, M, M)
    X_flat = X_bf.reshape(nb, M, F)

    # diag(A) (bf16-rounded -> f32, consistent with the A operand) + node mask
    d = jnp.diagonal(A_bf, axis1=1, axis2=2).astype(jnp.float32).reshape(nb, M, 1)
    node_valid = (jnp.arange(N_pad) < N).astype(jnp.float32)       # (N_pad,)
    msk = jnp.broadcast_to(node_valid, (b_pad, N_pad)).reshape(nb, M, 1)

    # ---- parameters ---------------------------------------------------------
    eps = jnp.stack([params["eps1"], params["eps2"]]).astype(jnp.float32)  # (2,)
    W1 = params["W1"].astype(jnp.bfloat16)
    W2 = params["W2"].astype(jnp.bfloat16)
    b1 = params["b1"].astype(jnp.float32)
    b2 = params["b2"].astype(jnp.float32)
    # lane-dense readout: zero-pad Wo columns; bias padded with -1e30 so the
    # padded lanes vanish from the log_softmax max / sum.
    Wo = jnp.pad(params["Wo"].astype(jnp.float32), ((0, 0), (0, C_pad - C)))
    Wo_x, Wo_h1, Wo_h2 = Wo[:F], Wo[F:F + H], Wo[F + H:]
    bo = jnp.concatenate(
        [params["bo"].astype(jnp.float32),
         jnp.full((1, C_pad - C), -1e30, jnp.float32)], axis=1)

    full = lambda shape: pl.BlockSpec(shape, lambda b: tuple(0 for _ in shape))

    flops_step = (2 * M * M * F + 2 * M * F * H          # layer 1
                  + 2 * M * M * H + 2 * M * H * H        # layer 2
                  + 2 * M * (F + 2 * H) * C_pad)         # readout
    cost = pl.CostEstimate(
        flops=int(nb * flops_step),
        transcendentals=int(nb * tb * C_pad),            # exp in log-softmax
        bytes_accessed=int(nb * (M * M + M * F) * 2      # bf16 A_bd, X
                           + nb * 2 * M * 4              # d, mask
                           + (F * H + H * H) * 2 + 2 * H * 4
                           + (F + 2 * H + 1) * C_pad * 4
                           + nb * tb * C_pad * 4))       # output

    out = pl.pallas_call(
        graphsnn_kernel,
        out_shape=jax.ShapeDtypeStruct((nb, tb, C_pad), jnp.float32),
        grid=(nb,),
        in_specs=[
            pl.BlockSpec((1, M, M), lambda b: (b, 0, 0)),        # A_bd (bf16)
            pl.BlockSpec((1, M, F), lambda b: (b, 0, 0)),        # X    (bf16)
            pl.BlockSpec((1, M, 1), lambda b: (b, 0, 0)),        # diag (f32)
            pl.BlockSpec((1, M, 1), lambda b: (b, 0, 0)),        # mask (f32)
            pl.BlockSpec(memory_space=pltpu.MemorySpace.SMEM),   # eps (2,)
            full((F, H)),                                        # W1 (bf16)
            full((1, H)),                                        # b1
            full((H, H)),                                        # W2 (bf16)
            full((1, H)),                                        # b2
            full((F, C_pad)),                                    # Wo_x
            full((H, C_pad)),                                    # Wo_h1
            full((H, C_pad)),                                    # Wo_h2
            full((1, C_pad)),                                    # bo
        ],
        out_specs=pl.BlockSpec((1, tb, C_pad), lambda b: (b, 0, 0)),
        compiler_params=pltpu.CompilerParams(
            dimension_semantics=("parallel",),
            vmem_limit_bytes=48 * 1024 * 1024),   # safe on v7x (64 MiB physical)
        cost_estimate=cost,
    )(A_bd, X_flat, d, msk, eps, W1, b1, W2, b2, Wo_x, Wo_h1, Wo_h2, bo)

    return out.reshape(b_pad, C_pad)[:B, :C]


# --------------------------- pure-JAX references ------------------------------
def graphsnn_reference(A, X, params):
    """Original (f32) semantics of the PyTorch module."""
    B, N, F = X.shape
    eye = jnp.eye(N, dtype=jnp.float32)[None]

    def conv(Hin, eps, W, b):
        a_mod = eps * eye * A + (1.0 - eye) * A
        return jax.nn.relu(jnp.einsum("bij,bjf->bif", a_mod, Hin) @ W + b)

    H1 = conv(X, params["eps1"], params["W1"], params["b1"])   # dropout p=0 -> id
    H2 = conv(H1, params["eps2"], params["W2"], params["b2"])
    pooled = jnp.concatenate([X, H1, H2], axis=2).sum(axis=1)  # (B, F+2H)
    logits = pooled @ params["Wo"] + params["bo"]
    return jax.nn.log_softmax(logits, axis=-1)


def graphsnn_reference_bf16(A, X, params):
    """Pure-JAX mirror of the kernel's mixed bf16/f32 compute path."""
    B, N, F = X.shape
    H = params["W1"].shape[1]
    Ab = A.astype(jnp.bfloat16)
    Xb = X.astype(jnp.bfloat16)
    Xf = Xb.astype(jnp.float32)
    d = jnp.diagonal(Ab, axis1=1, axis2=2).astype(jnp.float32)[..., None]

    def conv(hb, hf, eps, W, b):
        ah = (jnp.einsum("bij,bjf->bif", Ab, hb,
                         preferred_element_type=jnp.float32)
              + (eps.astype(jnp.float32) - 1.0) * d * hf)
        z = jnp.einsum("bnf,fh->bnh", ah.astype(jnp.bfloat16),
                       W.astype(jnp.bfloat16),
                       preferred_element_type=jnp.float32) + b.astype(jnp.float32)
        return jnp.maximum(z, 0.0)

    H1 = conv(Xb, Xf, params["eps1"], params["W1"], params["b1"])
    H2 = conv(H1.astype(jnp.bfloat16), H1, params["eps2"], params["W2"], params["b2"])

    Wo = params["Wo"].astype(jnp.float32)
    proj = (jnp.einsum("bnf,fc->bnc", Xf, Wo[:F])
            + jnp.einsum("bnh,hc->bnc", H1, Wo[F:F + H])
            + jnp.einsum("bnh,hc->bnc", H2, Wo[F + H:]))
    logits = proj.sum(axis=1) + params["bo"].astype(jnp.float32)
    return jax.nn.log_softmax(logits, axis=-1)


# ------------------------------ glue / setup ----------------------------------
def pad_graphs(x_all, adjs, sizes, n_max, f_in):
    """Mirrors GraphSNN.forward padding: split node features, zero-pad, batch."""
    Xs, As, start = [], [], 0
    for sha, adj in zip(sizes, adjs):
        xg = x_all[start:start + sha]
        start += sha
        Xs.append(jnp.concatenate(
            [xg, jnp.zeros((n_max - sha, f_in), jnp.float32)], axis=0))
        a = jnp.concatenate(
            [adj, jnp.zeros((n_max - sha, sha), jnp.float32)], axis=0)
        a = jnp.concatenate(
            [a, jnp.zeros((n_max, n_max - sha), jnp.float32)], axis=1)
        As.append(a)
    return jnp.stack(Xs), jnp.stack(As)


if __name__ == "__main__":
    # small shapes implied by the module
    B = 8                 # num_graphs
    N_MAX = 16            # args.N_nodes_max
    F_IN = 8              # args.num_features
    HID = 32              # args.hidden_dim
    C = 4                 # args.num_classes
    sizes = [10, 13, 16, 7, 12, 9, 16, 11]   # per-graph node counts (<= N_MAX)

    key = jax.random.PRNGKey(0)
    k = iter(jax.random.split(key, 24))

    # deterministic "data"
    x_all = jax.random.normal(next(k), (sum(sizes), F_IN), jnp.float32)
    adjs = [jax.random.uniform(next(k), (s, s), jnp.float32) for s in sizes]
    adjs = [0.5 * (a + a.T) for a in adjs]                 # symmetric weighted adj
    X, A = pad_graphs(x_all, adjs, sizes, N_MAX, F_IN)

    # deterministic parameters (shapes from __init__: 2 conv layers + out_proj)
    scale = 0.05
    params = {
        "eps1": jnp.float32(0.5),
        "eps2": jnp.float32(0.3),
        "W1": scale * jax.random.normal(next(k), (F_IN, HID), jnp.float32),
        "b1": scale * jax.random.normal(next(k), (1, HID), jnp.float32),
        "W2": scale * jax.random.normal(next(k), (HID, HID), jnp.float32),
        "b2": scale * jax.random.normal(next(k), (1, HID), jnp.float32),
        "Wo": scale * jax.random.normal(
            next(k), (F_IN + 2 * HID, C), jnp.float32),
        "bo": scale * jax.random.normal(next(k), (1, C), jnp.float32),
    }

    out = graphsnn_forward(A, X, params)
    out = jax.block_until_ready(out)
    assert out.shape == (B, C)

    # structural check against a reference that mirrors the kernel's mixed
    # bf16/f32 compute path (block-diag matmul / folded readout reorder float
    # accumulation slightly, so the tolerance is modest, not bitwise)
    ref_bf = graphsnn_reference_bf16(A, X, params)
    assert jnp.allclose(out, ref_bf, atol=3e-2, rtol=3e-2), (out, ref_bf)

    # sanity check against the original f32 semantics (tolerance sized for the
    # bf16 MXU-operand compute path)
    ref_f32 = graphsnn_reference(A, X, params)
    assert jnp.allclose(out, ref_f32, atol=1e-1, rtol=1e-1), (out, ref_f32)

    print("KERNEL_OK")
</pallas_src>

<mosaic_0001>
module attributes {stable_mosaic.version = 11 : i64} {
  func.func @graphsnn_kernel(%arg0: i32, %arg1: memref<1x128x128xbf16, #tpu.memory_space<vmem>>, %arg2: memref<1x128x8xbf16, #tpu.memory_space<vmem>>, %arg3: memref<1x128x1xf32, #tpu.memory_space<vmem>>, %arg4: memref<1x128x1xf32, #tpu.memory_space<vmem>>, %arg5: memref<2xf32, #tpu.memory_space<smem>>, %arg6: memref<8x32xbf16, #tpu.memory_space<vmem>>, %arg7: memref<1x32xf32, #tpu.memory_space<vmem>>, %arg8: memref<32x32xbf16, #tpu.memory_space<vmem>>, %arg9: memref<1x32xf32, #tpu.memory_space<vmem>>, %arg10: memref<8x128xf32, #tpu.memory_space<vmem>>, %arg11: memref<32x128xf32, #tpu.memory_space<vmem>>, %arg12: memref<32x128xf32, #tpu.memory_space<vmem>>, %arg13: memref<1x128xf32, #tpu.memory_space<vmem>>, %arg14: memref<1x8x128xf32, #tpu.memory_space<vmem>>) attributes {dimension_semantics = [#tpu.dimension_semantics<parallel>], iteration_bounds = array<i64: 1>, scalar_prefetch = 0 : i64, scratch_operands = 0 : i64, tpu.core_type = #tpu.core_type<tc>, window_params = [{transform_indices = @transform_0, window_bounds = array<i64: 1, 128, 128>}, {transform_indices = @transform_1, window_bounds = array<i64: 1, 128, 8>}, {transform_indices = @transform_2, window_bounds = array<i64: 1, 128, 1>}, {transform_indices = @transform_3, window_bounds = array<i64: 1, 128, 1>}, {transform_indices = @transform_4, window_bounds = array<i64: 2>}, {pipeline_mode = #tpu.pipeline_mode<synchronous>, transform_indices = @transform_5, window_bounds = array<i64: 8, 32>}, {pipeline_mode = #tpu.pipeline_mode<synchronous>, transform_indices = @transform_6, window_bounds = array<i64: 1, 32>}, {pipeline_mode = #tpu.pipeline_mode<synchronous>, transform_indices = @transform_7, window_bounds = array<i64: 32, 32>}, {pipeline_mode = #tpu.pipeline_mode<synchronous>, transform_indices = @transform_8, window_bounds = array<i64: 1, 32>}, {pipeline_mode = #tpu.pipeline_mode<synchronous>, transform_indices = @transform_9, window_bounds = array<i64: 8, 128>}, {pipeline_mode = #tpu.pipeline_mode<synchronous>, transform_indices = @transform_10, window_bounds = array<i64: 32, 128>}, {pipeline_mode = #tpu.pipeline_mode<synchronous>, transform_indices = @transform_11, window_bounds = array<i64: 32, 128>}, {pipeline_mode = #tpu.pipeline_mode<synchronous>, transform_indices = @transform_12, window_bounds = array<i64: 1, 128>}, {transform_indices = @transform_13, window_bounds = array<i64: 1, 8, 128>}]} {
    %c0 = arith.constant 0 : index
    %c0_0 = arith.constant 0 : index
    %c0_1 = arith.constant 0 : index
    %0 = vector.load %arg1[%c0, %c0_0, %c0_1] : memref<1x128x128xbf16, #tpu.memory_space<vmem>>, vector<1x128x128xbf16>
    %1 = vector.shape_cast %0 : vector<1x128x128xbf16> to vector<128x128xbf16>
    %c0_2 = arith.constant 0 : index
    %c0_3 = arith.constant 0 : index
    %c0_4 = arith.constant 0 : index
    %2 = vector.load %arg2[%c0_2, %c0_3, %c0_4] : memref<1x128x8xbf16, #tpu.memory_space<vmem>>, vector<1x128x8xbf16>
    %3 = vector.shape_cast %2 : vector<1x128x8xbf16> to vector<128x8xbf16>
    %c0_5 = arith.constant 0 : index
    %c0_6 = arith.constant 0 : index
    %c0_7 = arith.constant 0 : index
    %4 = vector.load %arg3[%c0_5, %c0_6, %c0_7] : memref<1x128x1xf32, #tpu.memory_space<vmem>>, vector<1x128x1xf32>
    %5 = vector.shape_cast %4 : vector<1x128x1xf32> to vector<128x1xf32>
    %c0_8 = arith.constant 0 : index
    %c0_9 = arith.constant 0 : index
    %c0_10 = arith.constant 0 : index
    %6 = vector.load %arg4[%c0_8, %c0_9, %c0_10] : memref<1x128x1xf32, #tpu.memory_space<vmem>>, vector<1x128x1xf32>
    %7 = vector.shape_cast %6 : vector<1x128x1xf32> to vector<128x1xf32>
    %c0_11 = arith.constant 0 : index
    %8 = memref.load %arg5[%c0_11] : memref<2xf32, #tpu.memory_space<smem>>
    %c1 = arith.constant 1 : index
    %9 = memref.load %arg5[%c1] : memref<2xf32, #tpu.memory_space<smem>>
    %10 = arith.extf %3 : vector<128x8xbf16> to vector<128x8xf32>
    %cst = arith.constant dense<0.000000e+00> : vector<128x8xf32>
    %11 = tpu.matmul %1, %3, %cst {dimension_numbers = #tpu.dot_dimension_numbers<[1], [0], [0], [1], [0, 0, 1, 1], [], []>} : vector<128x128xbf16>, vector<128x8xbf16>, vector<128x8xf32> -> vector<128x8xf32>
    %cst_12 = arith.constant 1.000000e+00 : f32
    %12 = arith.subf %8, %cst_12 : f32
    %13 = vector.broadcast %12 : f32 to vector<128x1xf32>
    %14 = arith.mulf %13, %5 : vector<128x1xf32>
    %15 = vector.broadcast %14 : vector<128x1xf32> to vector<128x8xf32>
    %16 = arith.mulf %15, %10 : vector<128x8xf32>
    %17 = arith.addf %11, %16 : vector<128x8xf32>
    %18 = arith.truncf %17 : vector<128x8xf32> to vector<128x8xbf16>
    %c0_13 = arith.constant 0 : index
    %c0_14 = arith.constant 0 : index
    %19 = vector.load %arg6[%c0_13, %c0_14] : memref<8x32xbf16, #tpu.memory_space<vmem>>, vector<8x32xbf16>
    %cst_15 = arith.constant dense<0.000000e+00> : vector<128x32xf32>
    %20 = tpu.matmul %18, %19, %cst_15 {dimension_numbers = #tpu.dot_dimension_numbers<[1], [0], [0], [1], [0, 0, 1, 1], [], []>} : vector<128x8xbf16>, vector<8x32xbf16>, vector<128x32xf32> -> vector<128x32xf32>
    %c0_16 = arith.constant 0 : index
    %c0_17 = arith.constant 0 : index
    %21 = vector.load %arg7[%c0_16, %c0_17] : memref<1x32xf32, #tpu.memory_space<vmem>>, vector<1x32xf32>
    %22 = vector.broadcast %21 : vector<1x32xf32> to vector<128x32xf32>
    %23 = arith.addf %20, %22 : vector<128x32xf32>
    %cst_18 = arith.constant 0.000000e+00 : f32
    %24 = vector.broadcast %cst_18 : f32 to vector<128x32xf32>
    %25 = arith.maximumf %23, %24 : vector<128x32xf32>
    %26 = arith.truncf %25 : vector<128x32xf32> to vector<128x32xbf16>
    %cst_19 = arith.constant dense<0.000000e+00> : vector<128x32xf32>
    %27 = tpu.matmul %1, %26, %cst_19 {dimension_numbers = #tpu.dot_dimension_numbers<[1], [0], [0], [1], [0, 0, 1, 1], [], []>} : vector<128x128xbf16>, vector<128x32xbf16>, vector<128x32xf32> -> vector<128x32xf32>
    %cst_20 = arith.constant 1.000000e+00 : f32
    %28 = arith.subf %9, %cst_20 : f32
    %29 = vector.broadcast %28 : f32 to vector<128x1xf32>
    %30 = arith.mulf %29, %5 : vector<128x1xf32>
    %31 = vector.broadcast %30 : vector<128x1xf32> to vector<128x32xf32>
    %32 = arith.mulf %31, %25 : vector<128x32xf32>
    %33 = arith.addf %27, %32 : vector<128x32xf32>
    %34 = arith.truncf %33 : vector<128x32xf32> to vector<128x32xbf16>
    %c0_21 = arith.constant 0 : index
    %c0_22 = arith.constant 0 : index
    %35 = vector.load %arg8[%c0_21, %c0_22] : memref<32x32xbf16, #tpu.memory_space<vmem>>, vector<32x32xbf16>
    %cst_23 = arith.constant dense<0.000000e+00> : vector<128x32xf32>
    %36 = tpu.matmul %34, %35, %cst_23 {dimension_numbers = #tpu.dot_dimension_numbers<[1], [0], [0], [1], [0, 0, 1, 1], [], []>} : vector<128x32xbf16>, vector<32x32xbf16>, vector<128x32xf32> -> vector<128x32xf32>
    %c0_24 = arith.constant 0 : index
    %c0_25 = arith.constant 0 : index
    %37 = vector.load %arg9[%c0_24, %c0_25] : memref<1x32xf32, #tpu.memory_space<vmem>>, vector<1x32xf32>
    %38 = vector.broadcast %37 : vector<1x32xf32> to vector<128x32xf32>
    %39 = arith.addf %36, %38 : vector<128x32xf32>
    %cst_26 = arith.constant 0.000000e+00 : f32
    %40 = vector.broadcast %cst_26 : f32 to vector<128x32xf32>
    %41 = arith.maximumf %39, %40 : vector<128x32xf32>
    %c0_27 = arith.constant 0 : index
    %c0_28 = arith.constant 0 : index
    %42 = vector.load %arg10[%c0_27, %c0_28] : memref<8x128xf32, #tpu.memory_space<vmem>>, vector<8x128xf32>
    %cst_29 = arith.constant dense<0.000000e+00> : vector<128x128xf32>
    %43 = tpu.matmul %10, %42, %cst_29 {dimension_numbers = #tpu.dot_dimension_numbers<[1], [0], [0], [1], [0, 0, 1, 1], [], []>} : vector<128x8xf32>, vector<8x128xf32>, vector<128x128xf32> -> vector<128x128xf32>
    %c0_30 = arith.constant 0 : index
    %c0_31 = arith.constant 0 : index
    %44 = vector.load %arg11[%c0_30, %c0_31] : memref<32x128xf32, #tpu.memory_space<vmem>>, vector<32x128xf32>
    %cst_32 = arith.constant dense<0.000000e+00> : vector<128x128xf32>
    %45 = tpu.matmul %25, %44, %cst_32 {dimension_numbers = #tpu.dot_dimension_numbers<[1], [0], [0], [1], [0, 0, 1, 1], [], []>} : vector<128x32xf32>, vector<32x128xf32>, vector<128x128xf32> -> vector<128x128xf32>
    %46 = arith.addf %43, %45 : vector<128x128xf32>
    %c0_33 = arith.constant 0 : index
    %c0_34 = arith.constant 0 : index
    %47 = vector.load %arg12[%c0_33, %c0_34] : memref<32x128xf32, #tpu.memory_space<vmem>>, vector<32x128xf32>
    %cst_35 = arith.constant dense<0.000000e+00> : vector<128x128xf32>
    %48 = tpu.matmul %41, %47, %cst_35 {dimension_numbers = #tpu.dot_dimension_numbers<[1], [0], [0], [1], [0, 0, 1, 1], [], []>} : vector<128x32xf32>, vector<32x128xf32>, vector<128x128xf32> -> vector<128x128xf32>
    %49 = arith.addf %46, %48 : vector<128x128xf32>
    %50 = vector.broadcast %7 : vector<128x1xf32> to vector<128x128xf32>
    %51 = arith.mulf %49, %50 : vector<128x128xf32>
    %52 = vector.shape_cast %51 : vector<128x128xf32> to vector<8x16x128xf32>
    %cst_36 = arith.constant dense<0.000000e+00> : vector<8x128xf32>
    %53 = vector.multi_reduction <add>, %52, %cst_36 [1] : vector<8x16x128xf32> to vector<8x128xf32>
    %c0_37 = arith.constant 0 : index
    %c0_38 = arith.constant 0 : index
    %54 = vector.load %arg13[%c0_37, %c0_38] : memref<1x128xf32, #tpu.memory_space<vmem>>, vector<1x128xf32>
    %55 = vector.broadcast %54 : vector<1x128xf32> to vector<8x128xf32>
    %56 = arith.addf %53, %55 : vector<8x128xf32>
    %cst_39 = arith.constant dense<0xFF800000> : vector<8xf32>
    %57 = vector.multi_reduction <maximumf>, %56, %cst_39 [1] : vector<8x128xf32> to vector<8xf32>
    %58 = vector.shape_cast %57 : vector<8xf32> to vector<8x1xf32>
    %59 = vector.broadcast %58 : vector<8x1xf32> to vector<8x128xf32>
    %60 = arith.subf %56, %59 : vector<8x128xf32>
    %61 = math.exp %60 : vector<8x128xf32>
    %cst_40 = arith.constant dense<0.000000e+00> : vector<8xf32>
    %62 = vector.multi_reduction <add>, %61, %cst_40 [1] : vector<8x128xf32> to vector<8xf32>
    %63 = vector.shape_cast %62 : vector<8xf32> to vector<8x1xf32>
    %64 = math.log %63 : vector<8x1xf32>
    %65 = vector.broadcast %64 : vector<8x1xf32> to vector<8x128xf32>
    %66 = arith.subf %60, %65 : vector<8x128xf32>
    %c0_41 = arith.constant 0 : index
    %c0_42 = arith.constant 0 : index
    %c0_43 = arith.constant 0 : index
    %67 = vector.load %arg14[%c0_41, %c0_42, %c0_43] : memref<1x8x128xf32, #tpu.memory_space<vmem>>, vector<1x8x128xf32>
    %68 = vector.shape_cast %67 : vector<1x8x128xf32> to vector<8x128xf32>
    %69 = vector.shape_cast %66 : vector<8x128xf32> to vector<1x8x128xf32>
    tpu.vector_store %arg14[%c0_41, %c0_42, %c0_43], %69 {strides = array<i32>} : memref<1x8x128xf32, #tpu.memory_space<vmem>>, vector<1x8x128xf32>,
    return
  }
  func.func @transform_0(%arg0: i32) -> (i32, i32, i32) {
    %c0_i32 = arith.constant 0 : i32
    %c0_i32_0 = arith.constant 0 : i32
    %c0_i32_1 = arith.constant 0 : i32
    return %arg0, %c0_i32, %c0_i32_0 : i32, i32, i32
  }
  func.func @transform_1(%arg0: i32) -> (i32, i32, i32) {
    %c0_i32 = arith.constant 0 : i32
    %c0_i32_0 = arith.constant 0 : i32
    %c0_i32_1 = arith.constant 0 : i32
    return %arg0, %c0_i32, %c0_i32_0 : i32, i32, i32
  }
  func.func @transform_2(%arg0: i32) -> (i32, i32, i32) {
    %c0_i32 = arith.constant 0 : i32
    %c0_i32_0 = arith.constant 0 : i32
    %c0_i32_1 = arith.constant 0 : i32
    return %arg0, %c0_i32, %c0_i32_0 : i32, i32, i32
  }
  func.func @transform_3(%arg0: i32) -> (i32, i32, i32) {
    %c0_i32 = arith.constant 0 : i32
    %c0_i32_0 = arith.constant 0 : i32
    %c0_i32_1 = arith.constant 0 : i32
    return %arg0, %c0_i32, %c0_i32_0 : i32, i32, i32
  }
  func.func @transform_4(%arg0: i32) -> i32 {
    %c0_i32 = arith.constant 0 : i32
    %c0_i32_0 = arith.constant 0 : i32
    return %c0_i32 : i32
  }
  func.func @transform_5(%arg0: i32) -> (i32, i32) {
    %c0_i32 = arith.constant 0 : i32
    %c0_i32_0 = arith.constant 0 : i32
    %c0_i32_1 = arith.constant 0 : i32
    return %c0_i32, %c0_i32_0 : i32, i32
  }
  func.func @transform_6(%arg0: i32) -> (i32, i32) {
    %c0_i32 = arith.constant 0 : i32
    %c0_i32_0 = arith.constant 0 : i32
    %c0_i32_1 = arith.constant 0 : i32
    return %c0_i32, %c0_i32_0 : i32, i32
  }
  func.func @transform_7(%arg0: i32) -> (i32, i32) {
    %c0_i32 = arith.constant 0 : i32
    %c0_i32_0 = arith.constant 0 : i32
    %c0_i32_1 = arith.constant 0 : i32
    return %c0_i32, %c0_i32_0 : i32, i32
  }
  func.func @transform_8(%arg0: i32) -> (i32, i32) {
    %c0_i32 = arith.constant 0 : i32
    %c0_i32_0 = arith.constant 0 : i32
    %c0_i32_1 = arith.constant 0 : i32
    return %c0_i32, %c0_i32_0 : i32, i32
  }
  func.func @transform_9(%arg0: i32) -> (i32, i32) {
    %c0_i32 = arith.constant 0 : i32
    %c0_i32_0 = arith.constant 0 : i32
    %c0_i32_1 = arith.constant 0 : i32
    return %c0_i32, %c0_i32_0 : i32, i32
  }
  func.func @transform_10(%arg0: i32) -> (i32, i32) {
    %c0_i32 = arith.constant 0 : i32
    %c0_i32_0 = arith.constant 0 : i32
    %c0_i32_1 = arith.constant 0 : i32
    return %c0_i32, %c0_i32_0 : i32, i32
  }
  func.func @transform_11(%arg0: i32) -> (i32, i32) {
    %c0_i32 = arith.constant 0 : i32
    %c0_i32_0 = arith.constant 0 : i32
    %c0_i32_1 = arith.constant 0 : i32
    return %c0_i32, %c0_i32_0 : i32, i32
  }
  func.func @transform_12(%arg0: i32) -> (i32, i32) {
    %c0_i32 = arith.constant 0 : i32
    %c0_i32_0 = arith.constant 0 : i32
    %c0_i32_1 = arith.constant 0 : i32
    return %c0_i32, %c0_i32_0 : i32, i32
  }
  func.func @transform_13(%arg0: i32) -> (i32, i32, i32) {
    %c0_i32 = arith.constant 0 : i32
    %c0_i32_0 = arith.constant 0 : i32
    %c0_i32_1 = arith.constant 0 : i32
    return %arg0, %c0_i32, %c0_i32_0 : i32, i32, i32
  }
}

</mosaic_0001>

<llo_original>
// kernel: graphsnn_forward.1
$region0: #{graphsnn_forward.1}
  #allocation0 [shape = 'u32[]', space=smem, size = 0x4, offset = 0x4, fixed_abs, tag = 'smem constant byte address 0x4 - core index']
  #allocation1 [shape = 'u32[144,128]{1,0:T(1,128)}', space=vmem, size = 0x12000, scoped, tag = 'internal scratch']
  %s0 = inlined_call_operand.vmem [shape: bf16[1,128,128], index: 0, kind: input, shape index: {}]
  %s1 = inlined_call_operand.vmem [shape: bf16[1,128,8], index: 1, kind: input, shape index: {}]
  %s2 = inlined_call_operand.vmem [shape: f32[1,128,1], index: 2, kind: input, shape index: {}]
  %s3 = inlined_call_operand.vmem [shape: f32[1,128,1], index: 3, kind: input, shape index: {}]
  %s4 = inlined_call_operand.vmem [shape: f32[2], index: 4, kind: input, shape index: {}]
  %s5 = inlined_call_operand.vmem [shape: bf16[8,32], index: 5, kind: input, shape index: {}]
  %s6 = inlined_call_operand.vmem [shape: f32[1,32], index: 6, kind: input, shape index: {}]
  %s7 = inlined_call_operand.vmem [shape: bf16[32,32], index: 7, kind: input, shape index: {}]
  %s8 = inlined_call_operand.vmem [shape: f32[1,32], index: 8, kind: input, shape index: {}]
  %s9 = inlined_call_operand.vmem [shape: f32[8,128], index: 9, kind: input, shape index: {}]
  %s10 = inlined_call_operand.vmem [shape: f32[32,128], index: 10, kind: input, shape index: {}]
  %s11 = inlined_call_operand.vmem [shape: f32[32,128], index: 11, kind: input, shape index: {}]
  %s12 = inlined_call_operand.vmem [shape: f32[1,128], index: 12, kind: input, shape index: {}]
  %s13 = inlined_call_operand.vmem [shape: f32[1,8,128], index: 13, kind: output, shape index: {}]
  %s14 = sld [smem:[#allocation0]]
  $region66: #{graphsnn_forward.1} parent=0
    _
  %s16 = ssub.s32 1, %s14
  %s17 = scalar_select 0, %s16, %s14
  $region1: #{graphsnn_forward.1} parent=0
    #allocation2 [shape = 'u8[512]{0}', space=smem, size = 0x200, scoped, tag = 'input window, operand 4, single buffered']
    #allocation3 [shape = 's32[1]{0}', space=sflag, size = 0x4, scoped, tag = 'scoped memory for graphsnn_forward.1']
    %18 = vsyncpa [#allocation3], 0
    // Predicated region
    $region2: #{graphsnn_forward.1} parent=1 // pred_check
      _
    $region3: #{graphsnn_forward.1} parent=1 // pred_check_branch
      %20 = sbr.rel (0) target = $region5
    $region4: #{graphsnn_forward.1} parent=1 // pred_region
      _
    $region5: #{graphsnn_forward.1} parent=1 // pred_fallthru
      _
    // Predicated region
    $region6: #{graphsnn_forward.1} parent=1 // pred_check
      _
    $region7: #{graphsnn_forward.1} parent=1 // pred_check_branch
      %22 = sbr.rel (0) target = $region9
    $region8: #{graphsnn_forward.1} parent=1 // pred_region
      _
    $region9: #{graphsnn_forward.1} parent=1 // pred_fallthru
      _
    // Predicated region
    $region10: #{graphsnn_forward.1} parent=1 // pred_check
      _
    $region11: #{graphsnn_forward.1} parent=1 // pred_check_branch
      %24 = sbr.rel (0) target = $region13
    $region12: #{graphsnn_forward.1} parent=1 // pred_region
      _
    $region13: #{graphsnn_forward.1} parent=1 // pred_fallthru
      _
    // Predicated region
    $region14: #{graphsnn_forward.1} parent=1 // pred_check
      _
    $region15: #{graphsnn_forward.1} parent=1 // pred_check_branch
      %26 = sbr.rel (0) target = $region17
    $region16: #{graphsnn_forward.1} parent=1 // pred_region
      _
    $region17: #{graphsnn_forward.1} parent=1 // pred_fallthru
      _
    // Predicated region
    $region18: #{graphsnn_forward.1} parent=1 // pred_check
      _
    $region19: #{graphsnn_forward.1} parent=1 // pred_check_branch
      %28 = sbr.rel (0) target = $region21
    $region20: #{graphsnn_forward.1} parent=1 // pred_region
      %s30 = ssub.s32 16, 16
      %31 = vsyncadd [#allocation3], %s30
      %s33 = sshll.u32 %s4, 4
      %s34 = int_to_ptr.vmem [resolvable:$true] %s33
      %36 = dma.vmem_to_smem %s34, 16, [#allocation2], [#allocation3]
    $region21: #{graphsnn_forward.1} parent=1 // pred_fallthru
      _
    // Predicated region
    $region22: #{graphsnn_forward.1} parent=1 // pred_check
      _
    $region23: #{graphsnn_forward.1} parent=1 // pred_check_branch
      %38 = sbr.rel (0) target = $region25
    $region24: #{graphsnn_forward.1} parent=1 // pred_region
      _
    $region25: #{graphsnn_forward.1} parent=1 // pred_fallthru
      _
    // Predicated region
    $region26: #{graphsnn_forward.1} parent=1 // pred_check
      _
    $region27: #{graphsnn_forward.1} parent=1 // pred_check_branch
      %40 = sbr.rel (0) target = $region29
    $region28: #{graphsnn_forward.1} parent=1 // pred_region
      _
    $region29: #{graphsnn_forward.1} parent=1 // pred_fallthru
      _
    // Predicated region
    $region30: #{graphsnn_forward.1} parent=1 // pred_check
      _
    $region31: #{graphsnn_forward.1} parent=1 // pred_check_branch
      %42 = sbr.rel (0) target = $region33
    $region32: #{graphsnn_forward.1} parent=1 // pred_region
      _
    $region33: #{graphsnn_forward.1} parent=1 // pred_fallthru
      _
    // Predicated region
    $region34: #{graphsnn_forward.1} parent=1 // pred_check
      _
    $region35: #{graphsnn_forward.1} parent=1 // pred_check_branch
      %44 = sbr.rel (0) target = $region37
    $region36: #{graphsnn_forward.1} parent=1 // pred_region
      _
    $region37: #{graphsnn_forward.1} parent=1 // pred_fallthru
      _
    // Predicated region
    $region38: #{graphsnn_forward.1} parent=1 // pred_check
      _
    $region39: #{graphsnn_forward.1} parent=1 // pred_check_branch
      %46 = sbr.rel (0) target = $region41
    $region40: #{graphsnn_forward.1} parent=1 // pred_region
      _
    $region41: #{graphsnn_forward.1} parent=1 // pred_fallthru
      _
    // Predicated region
    $region42: #{graphsnn_forward.1} parent=1 // pred_check
      _
    $region43: #{graphsnn_forward.1} parent=1 // pred_check_branch
      %48 = sbr.rel (0) target = $region45
    $region44: #{graphsnn_forward.1} parent=1 // pred_region
      _
    $region45: #{graphsnn_forward.1} parent=1 // pred_fallthru
      _
    // Predicated region
    $region46: #{graphsnn_forward.1} parent=1 // pred_check
      _
    $region47: #{graphsnn_forward.1} parent=1 // pred_check_branch
      %50 = sbr.rel (0) target = $region49
    $region48: #{graphsnn_forward.1} parent=1 // pred_region
      _
    $region49: #{graphsnn_forward.1} parent=1 // pred_fallthru
      _
    // Predicated region
    $region50: #{graphsnn_forward.1} parent=1 // pred_check
      _
    $region51: #{graphsnn_forward.1} parent=1 // pred_check_branch
      %52 = sbr.rel (0) target = $region53
    $region52: #{graphsnn_forward.1} parent=1 // pred_region
      _
    $region53: #{graphsnn_forward.1} parent=1 // pred_fallthru
      _
    // Predicated region
    $region54: #{graphsnn_forward.1} parent=1 // pred_check
      _
    $region55: #{graphsnn_forward.1} parent=1 // pred_check_branch
      %54 = sbr.rel (0) target = $region57
    $region56: #{graphsnn_forward.1} parent=1 // pred_region
      %55 = dma.done [#allocation3], 16
    $region57: #{graphsnn_forward.1} parent=1 // pred_fallthru
      _
    %56 = sfence
    %v58 = vld [vmem:[%s0] sm:$0xf]
    %v59 = vld [vmem:[%s0 + $0x4] sm:$0xf]
    %v60 = vld [vmem:[%s0 + $0x8] sm:$0xf]
    %v61 = vld [vmem:[%s0 + $0xc] sm:$0xf]
    %v62 = vld [vmem:[%s0 + $0x10] sm:$0xf]
    %v63 = vld [vmem:[%s0 + $0x14] sm:$0xf]
    %v64 = vld [vmem:[%s0 + $0x18] sm:$0xf]
    %v65 = vld [vmem:[%s0 + $0x1c] sm:$0xf]
    %v66 = vld [vmem:[%s0 + $0x20] sm:$0xf]
    %v67 = vld [vmem:[%s0 + $0x24] sm:$0xf]
    %v68 = vld [vmem:[%s0 + $0x28] sm:$0xf]
    %v69 = vld [vmem:[%s0 + $0x2c] sm:$0xf]
    %v70 = vld [vmem:[%s0 + $0x30] sm:$0xf]
    %v71 = vld [vmem:[%s0 + $0x34] sm:$0xf]
    %v72 = vld [vmem:[%s0 + $0x38] sm:$0xf]
    %v73 = vld [vmem:[%s0 + $0x3c] sm:$0xf]
    %v74 = vld [vmem:[%s1] sm:$0xf]
    %v75 = vld [vmem:[%s1 + $0x4] sm:$0xf]
    %v76 = vld [vmem:[%s1 + $0x8] sm:$0xf]
    %v77 = vld [vmem:[%s1 + $0xc] sm:$0xf]
    %v78 = vld [vmem:[%s1 + $0x10] sm:$0xf]
    %v79 = vld [vmem:[%s1 + $0x14] sm:$0xf]
    %v80 = vld [vmem:[%s1 + $0x18] sm:$0xf]
    %v81 = vld [vmem:[%s1 + $0x1c] sm:$0xf]
    %v82 = vld [vmem:[%s1 + $0x20] sm:$0xf]
    %v83 = vld [vmem:[%s1 + $0x24] sm:$0xf]
    %v84 = vld [vmem:[%s1 + $0x28] sm:$0xf]
    %v85 = vld [vmem:[%s1 + $0x2c] sm:$0xf]
    %v86 = vld [vmem:[%s1 + $0x30] sm:$0xf]
    %v87 = vld [vmem:[%s1 + $0x34] sm:$0xf]
    %v88 = vld [vmem:[%s1 + $0x38] sm:$0xf]
    %v89 = vld [vmem:[%s1 + $0x3c] sm:$0xf]
    %v90 = vld [vmem:[%s2] sm:$0xff]
    %v91 = vld [vmem:[%s2 + $0x8] sm:$0xff]
    %v92 = vld [vmem:[%s2 + $0x10] sm:$0xff]
    %v93 = vld [vmem:[%s2 + $0x18] sm:$0xff]
    %v94 = vld [vmem:[%s2 + $0x20] sm:$0xff]
    %v95 = vld [vmem:[%s2 + $0x28] sm:$0xff]
    %v96 = vld [vmem:[%s2 + $0x30] sm:$0xff]
    %v97 = vld [vmem:[%s2 + $0x38] sm:$0xff]
    %v98 = vld [vmem:[%s2 + $0x40] sm:$0xff]
    %v99 = vld [vmem:[%s2 + $0x48] sm:$0xff]
    %v100 = vld [vmem:[%s2 + $0x50] sm:$0xff]
    %v101 = vld [vmem:[%s2 + $0x58] sm:$0xff]
    %v102 = vld [vmem:[%s2 + $0x60] sm:$0xff]
    %v103 = vld [vmem:[%s2 + $0x68] sm:$0xff]
    %v104 = vld [vmem:[%s2 + $0x70] sm:$0xff]
    %v105 = vld [vmem:[%s2 + $0x78] sm:$0xff]
    %v106 = vld [vmem:[%s3] sm:$0xff]
    %v107 = vld [vmem:[%s3 + $0x8] sm:$0xff]
    %v108 = vld [vmem:[%s3 + $0x10] sm:$0xff]
    %v109 = vld [vmem:[%s3 + $0x18] sm:$0xff]
    %v110 = vld [vmem:[%s3 + $0x20] sm:$0xff]
    %v111 = vld [vmem:[%s3 + $0x28] sm:$0xff]
    %v112 = vld [vmem:[%s3 + $0x30] sm:$0xff]
    %v113 = vld [vmem:[%s3 + $0x38] sm:$0xff]
    %v114 = vld [vmem:[%s3 + $0x40] sm:$0xff]
    %v115 = vld [vmem:[%s3 + $0x48] sm:$0xff]
    %v116 = vld [vmem:[%s3 + $0x50] sm:$0xff]
    %v117 = vld [vmem:[%s3 + $0x58] sm:$0xff]
    %v118 = vld [vmem:[%s3 + $0x60] sm:$0xff]
    %v119 = vld [vmem:[%s3 + $0x68] sm:$0xff]
    %v120 = vld [vmem:[%s3 + $0x70] sm:$0xff]
    %v121 = vld [vmem:[%s3 + $0x78] sm:$0xff]
    %s122 = sld [smem:[#allocation2]]
    %s123 = sld [smem:[#allocation2 + $0x1]]
    %v124 = vunpack.c.l.bf16 %v74
    %v125 = vunpack.c.l.bf16 %v75
    %v126 = vunpack.c.l.bf16 %v76
    %v127 = vunpack.c.l.bf16 %v77
    %v128 = vunpack.c.l.bf16 %v78
    %v129 = vunpack.c.l.bf16 %v79
    %v130 = vunpack.c.l.bf16 %v80
    %v131 = vunpack.c.l.bf16 %v81
    %v132 = vunpack.c.l.bf16 %v82
    %v133 = vunpack.c.l.bf16 %v83
    %v134 = vunpack.c.l.bf16 %v84
    %v135 = vunpack.c.l.bf16 %v85
    %v136 = vunpack.c.l.bf16 %v86
    %v137 = vunpack.c.l.bf16 %v87
    %v138 = vunpack.c.l.bf16 %v88
    %v139 = vunpack.c.l.bf16 %v89
    %s140 = ssub.f32 %s122, 1.0
    %v141 = vstv %s140
    %v142 = vmul.f32 %v141, %v90
    %v143 = vmul.f32 %v141, %v91
    %v144 = vmul.f32 %v141, %v92
    %v145 = vmul.f32 %v141, %v93
    %v146 = vmul.f32 %v141, %v94
    %v147 = vmul.f32 %v141, %v95
    %v148 = vmul.f32 %v141, %v96
    %v149 = vmul.f32 %v141, %v97
    %v150 = vmul.f32 %v141, %v98
    %v151 = vmul.f32 %v141, %v99
    %v152 = vmul.f32 %v141, %v100
    %v153 = vmul.f32 %v141, %v101
    %v154 = vmul.f32 %v141, %v102
    %v155 = vmul.f32 %v141, %v103
    %v156 = vmul.f32 %v141, %v104
    %v157 = vmul.f32 %v141, %v105
    %159 = vset.pattern.permute.xlu0 0
    %160 = vperm.xlu0 %159, %v142
    %v161 = vpop.permute.xlu0 %160
    %164 = vset.pattern.permute.xlu0 0
    %165 = vperm.xlu0 %164, %v143
    %v166 = vpop.permute.xlu0 %165
    %169 = vset.pattern.permute.xlu0 0
    %170 = vperm.xlu0 %169, %v144
    %v171 = vpop.permute.xlu0 %170
    %174 = vset.pattern.permute.xlu0 0
    %175 = vperm.xlu0 %174, %v145
    %v176 = vpop.permute.xlu0 %175
    %179 = vset.pattern.permute.xlu0 0
    %180 = vperm.xlu0 %179, %v146
    %v181 = vpop.permute.xlu0 %180
    %184 = vset.pattern.permute.xlu0 0
    %185 = vperm.xlu0 %184, %v147
    %v186 = vpop.permute.xlu0 %185
    %189 = vset.pattern.permute.xlu0 0
    %190 = vperm.xlu0 %189, %v148
    %v191 = vpop.permute.xlu0 %190
    %194 = vset.pattern.permute.xlu0 0
    %195 = vperm.xlu0 %194, %v149
    %v196 = vpop.permute.xlu0 %195
    %199 = vset.pattern.permute.xlu0 0
    %200 = vperm.xlu0 %199, %v150
    %v201 = vpop.permute.xlu0 %200
    %204 = vset.pattern.permute.xlu0 0
    %205 = vperm.xlu0 %204, %v151
    %v206 = vpop.permute.xlu0 %205
    %209 = vset.pattern.permute.xlu0 0
    %210 = vperm.xlu0 %209, %v152
    %v211 = vpop.permute.xlu0 %210
    %214 = vset.pattern.permute.xlu0 0
    %215 = vperm.xlu0 %214, %v153
    %v216 = vpop.permute.xlu0 %215
    %219 = vset.pattern.permute.xlu0 0
    %220 = vperm.xlu0 %219, %v154
    %v221 = vpop.permute.xlu0 %220
    %224 = vset.pattern.permute.xlu0 0
    %225 = vperm.xlu0 %224, %v155
    %v226 = vpop.permute.xlu0 %225
    %229 = vset.pattern.permute.xlu0 0
    %230 = vperm.xlu0 %229, %v156
    %v231 = vpop.permute.xlu0 %230
    %234 = vset.pattern.permute.xlu0 0
    %235 = vperm.xlu0 %234, %v157
    %v236 = vpop.permute.xlu0 %235
    %v238 = vmul.f32 %v161, %v124
    %v239 = vmul.f32 %v166, %v125
    %v240 = vmul.f32 %v171, %v126
    %v241 = vmul.f32 %v176, %v127
    %v242 = vmul.f32 %v181, %v128
    %v243 = vmul.f32 %v186, %v129
    %v244 = vmul.f32 %v191, %v130
    %v245 = vmul.f32 %v196, %v131
    %v246 = vmul.f32 %v201, %v132
    %v247 = vmul.f32 %v206, %v133
    %v248 = vmul.f32 %v211, %v134
    %v249 = vmul.f32 %v216, %v135
    %v250 = vmul.f32 %v221, %v136
    %v251 = vmul.f32 %v226, %v137
    %v252 = vmul.f32 %v231, %v138
    %v253 = vmul.f32 %v236, %v139
    %v270 = vunpack.c.l.b16 %v58
    %v271 = vunpack.c.l.b16 %v59
    %v272 = vunpack.c.l.b16 %v60
    %v273 = vunpack.c.l.b16 %v61
    %v274 = vunpack.c.l.b16 %v62
    %v275 = vunpack.c.l.b16 %v63
    %v276 = vunpack.c.l.b16 %v64
    %v277 = vunpack.c.l.b16 %v65
    %v278 = vunpack.c.l.b16 %v66
    %v279 = vunpack.c.l.b16 %v67
    %v280 = vunpack.c.l.b16 %v68
    %v281 = vunpack.c.l.b16 %v69
    %v282 = vunpack.c.l.b16 %v70
    %v283 = vunpack.c.l.b16 %v71
    %v284 = vunpack.c.l.b16 %v72
    %v285 = vunpack.c.l.b16 %v73
    %v286 = vpack.c.b16 %v271, %v270
    %v287 = vpack.c.b16 %v273, %v272
    %v288 = vpack.c.b16 %v275, %v274
    %v289 = vpack.c.b16 %v277, %v276
    %v290 = vpack.c.b16 %v279, %v278
    %v291 = vpack.c.b16 %v281, %v280
    %v292 = vpack.c.b16 %v283, %v282
    %v293 = vpack.c.b16 %v285, %v284
    %v318 = vunpack.c.l.b16 %v74
    %v319 = vunpack.c.l.b16 %v75
    %v320 = vunpack.c.l.b16 %v76
    %v321 = vunpack.c.l.b16 %v77
    %v322 = vunpack.c.l.b16 %v78
    %v323 = vunpack.c.l.b16 %v79
    %v324 = vunpack.c.l.b16 %v80
    %v325 = vunpack.c.l.b16 %v81
    %v326 = vunpack.c.l.b16 %v82
    %v327 = vunpack.c.l.b16 %v83
    %v328 = vunpack.c.l.b16 %v84
    %v329 = vunpack.c.l.b16 %v85
    %v330 = vunpack.c.l.b16 %v86
    %v331 = vunpack.c.l.b16 %v87
    %v332 = vunpack.c.l.b16 %v88
    %v333 = vunpack.c.l.b16 %v89
    %v334 = vpack.c.b16 %v319, %v318
    %v335 = vpack.c.b16 %v321, %v320
    %v336 = vpack.c.b16 %v323, %v322
    %v337 = vpack.c.b16 %v325, %v324
    %v338 = vpack.c.b16 %v327, %v326
    %v339 = vpack.c.b16 %v329, %v328
    %v340 = vpack.c.b16 %v331, %v330
    %v341 = vpack.c.b16 %v333, %v332
    %350 = vmatprep.subr.bf16.mxu0 0
    %351 = vmatpush1.bf16.msra.mxu0 %v334
    %352 = vmatprep.subr.bf16.mxu0 0
    %353 = vmatpush1.bf16.msra.mxu0 %v335
    %354 = vmatprep.subr.bf16.mxu0 0
    %355 = vmatpush1.bf16.msra.mxu0 %v336
    %356 = vmatprep.subr.bf16.mxu0 0
    %357 = vmatpush1.bf16.msra.mxu0 %v337
    %358 = vmatprep.subr.bf16.mxu0 0
    %359 = vmatpush1.bf16.msra.mxu0 %v338
    %360 = vmatprep.subr.bf16.mxu0 0
    %361 = vmatpush1.bf16.msra.mxu0 %v339
    %362 = vmatprep.subr.bf16.mxu0 0
    %363 = vmatpush1.bf16.msra.mxu0 %v340
    %364 = vmatprep.subr.bf16.mxu0 0
    %365 = vmatpush1.bf16.msra.mxu0 %v341
    %366 = vmatprep.subr.bf16.mxu0 0
    %367 = vmatpush1.bf16.msra.mxu0 0
    %368 = vmatprep.subr.bf16.mxu0 0
    %369 = vmatpush1.bf16.msra.mxu0 0
    %370 = vmatprep.subr.bf16.mxu0 0
    %371 = vmatpush1.bf16.msra.mxu0 0
    %372 = vmatprep.subr.bf16.mxu0 0
    %373 = vmatpush1.bf16.msra.mxu0 0
    %374 = vmatprep.subr.bf16.mxu0 0
    %375 = vmatpush1.bf16.msra.mxu0 0
    %376 = vmatprep.subr.bf16.mxu0 0
    %377 = vmatpush1.bf16.msra.mxu0 0
    %378 = vmatprep.subr.bf16.mxu0 0
    %379 = vmatpush1.bf16.msra.mxu0 0
    %380 = vmatprep.subr.bf16.mxu0 0
    %381 = vmatpush1.bf16.msra.mxu0 0
    %382 = vmatprep.mubr.bf16.mxu0 0
    %383 = vmatmul.mubr.bf16.gmra.mrb[0].mxu0 %v286
    %v384 = vpop.f32.mrb[0].mxu0
    %v385 = vadd.f32 %v238, %v384
    %v386 = vpop.f32.mrb[0].mxu0
    %v387 = vpop.f32.mrb[0].mxu0
    %v388 = vadd.f32 %v239, %v387
    %v389 = vpop.f32.mrb[0].mxu0
    %390 = vmatprep.mubr.bf16.mxu0 0
    %391 = vmatmul.mubr.bf16.gmra.mrb[0].mxu0 %v287
    %v392 = vpop.f32.mrb[0].mxu0
    %v393 = vadd.f32 %v240, %v392
    %v394 = vpop.f32.mrb[0].mxu0
    %v395 = vpop.f32.mrb[0].mxu0
    %v396 = vadd.f32 %v241, %v395
    %v397 = vpop.f32.mrb[0].mxu0
    %398 = vmatprep.mubr.bf16.mxu0 0
    %399 = vmatmul.mubr.bf16.gmra.mrb[0].mxu0 %v288
    %v400 = vpop.f32.mrb[0].mxu0
    %v401 = vadd.f32 %v242, %v400
    %v402 = vpop.f32.mrb[0].mxu0
    %v403 = vpop.f32.mrb[0].mxu0
    %v404 = vadd.f32 %v243, %v403
    %v405 = vpop.f32.mrb[0].mxu0
    %406 = vmatprep.mubr.bf16.mxu0 0
    %407 = vmatmul.mubr.bf16.gmra.mrb[0].mxu0 %v289
    %v408 = vpop.f32.mrb[0].mxu0
    %v409 = vadd.f32 %v244, %v408
    %v410 = vpop.f32.mrb[0].mxu0
    %v411 = vpop.f32.mrb[0].mxu0
    %v412 = vadd.f32 %v245, %v411
    %v413 = vpop.f32.mrb[0].mxu0
    %414 = vmatprep.mubr.bf16.mxu0 0
    %415 = vmatmul.mubr.bf16.gmra.mrb[0].mxu0 %v290
    %v416 = vpop.f32.mrb[0].mxu0
    %v417 = vadd.f32 %v246, %v416
    %v418 = vpop.f32.mrb[0].mxu0
    %v419 = vpop.f32.mrb[0].mxu0
    %v420 = vadd.f32 %v247, %v419
    %v421 = vpop.f32.mrb[0].mxu0
    %422 = vmatprep.mubr.bf16.mxu0 0
    %423 = vmatmul.mubr.bf16.gmra.mrb[0].mxu0 %v291
    %v424 = vpop.f32.mrb[0].mxu0
    %v425 = vadd.f32 %v248, %v424
    %v426 = vpop.f32.mrb[0].mxu0
    %v427 = vpop.f32.mrb[0].mxu0
    %v428 = vadd.f32 %v249, %v427
    %v429 = vpop.f32.mrb[0].mxu0
    %430 = vmatprep.mubr.bf16.mxu0 0
    %431 = vmatmul.mubr.bf16.gmra.mrb[0].mxu0 %v292
    %v432 = vpop.f32.mrb[0].mxu0
    %v433 = vadd.f32 %v250, %v432
    %v434 = vpop.f32.mrb[0].mxu0
    %v435 = vpop.f32.mrb[0].mxu0
    %v436 = vadd.f32 %v251, %v435
    %v437 = vpop.f32.mrb[0].mxu0
    %438 = vmatprep.mubr.bf16.mxu0 0
    %439 = vmatmul.mubr.bf16.gmra.mrb[0].mxu0 %v293
    %v440 = vpop.f32.mrb[0].mxu0
    %v441 = vadd.f32 %v252, %v440
    %v442 = vpop.f32.mrb[0].mxu0
    %v443 = vpop.f32.mrb[0].mxu0
    %v444 = vadd.f32 %v253, %v443
    %v445 = vpop.f32.mrb[0].mxu0
    %446 = vdwg.mxu0
    %v447 = vpack.c.bf16 %v388, %v385
    %v448 = vpack.c.bf16 %v396, %v393
    %v449 = vpack.c.bf16 %v404, %v401
    %v450 = vpack.c.bf16 %v412, %v409
    %v451 = vpack.c.bf16 %v420, %v417
    %v452 = vpack.c.bf16 %v428, %v425
    %v453 = vpack.c.bf16 %v436, %v433
    %v454 = vpack.c.bf16 %v444, %v441
    %v455 = vld [vmem:[%s5] sm:$0xf]
    %v456 = vld [vmem:[%s6] sm:$0x1]
    %v458 = vlaneseq
    %v459 = vshrl.u32 %v458, 7
    %v460 = vsub.s32 0, %v459
    %v461 = vrot.slane %v456, %v460
    %vm463 = vcmask 64512
    %v465 = vsel %vm463, %v447, 0
    %v468 = vsel %vm463, %v448, 0
    %v471 = vsel %vm463, %v449, 0
    %v474 = vsel %vm463, %v450, 0
    %v477 = vsel %vm463, %v451, 0
    %v480 = vsel %vm463, %v452, 0
    %v483 = vsel %vm463, %v453, 0
    %v486 = vsel %vm463, %v454, 0
    %vm488 = vcmask 1043456
    %v490 = vsel %vm488, %v455, 0
    %492 = vmatprep.subr.bf16.mxu0 0
    %493 = vmatpush1.bf16.msra.mxu0 %v490
    %494 = vmatprep.subr.bf16.mxu0 0
    %495 = vmatpush1.bf16.msra.mxu0 0
    %496 = vmatprep.subr.bf16.mxu0 0
    %497 = vmatpush1.bf16.msra.mxu0 0
    %498 = vmatprep.subr.bf16.mxu0 0
    %499 = vmatpush1.bf16.msra.mxu0 0
    %500 = vmatprep.subr.bf16.mxu0 0
    %501 = vmatpush1.bf16.msra.mxu0 0
    %502 = vmatprep.subr.bf16.mxu0 0
    %503 = vmatpush1.bf16.msra.mxu0 0
    %504 = vmatprep.subr.bf16.mxu0 0
    %505 = vmatpush1.bf16.msra.mxu0 0
    %506 = vmatprep.subr.bf16.mxu0 0
    %507 = vmatpush1.bf16.msra.mxu0 0
    %508 = vmatprep.subr.bf16.mxu0 0
    %509 = vmatpush1.bf16.msra.mxu0 0
    %510 = vmatprep.subr.bf16.mxu0 0
    %511 = vmatpush1.bf16.msra.mxu0 0
    %512 = vmatprep.subr.bf16.mxu0 0
    %513 = vmatpush1.bf16.msra.mxu0 0
    %514 = vmatprep.subr.bf16.mxu0 0
    %515 = vmatpush1.bf16.msra.mxu0 0
    %516 = vmatprep.subr.bf16.mxu0 0
    %517 = vmatpush1.bf16.msra.mxu0 0
    %518 = vmatprep.subr.bf16.mxu0 0
    %519 = vmatpush1.bf16.msra.mxu0 0
    %520 = vmatprep.subr.bf16.mxu0 0
    %521 = vmatpush1.bf16.msra.mxu0 0
    %522 = vmatprep.subr.bf16.mxu0 0
    %523 = vmatpush1.bf16.msra.mxu0 0
    %524 = vmatprep.mubr.bf16.mxu0 0
    %525 = vmatmul.mubr.bf16.gmra.mrb[0].mxu0 %v465
    %v526 = vpop.f32.mrb[0].mxu0
    %v527 = vadd.f32 %v461, %v526
    %v528 = vpop.f32.mrb[0].mxu0
    %v529 = vpop.f32.mrb[0].mxu0
    %v530 = vadd.f32 %v461, %v529
    %v531 = vpop.f32.mrb[0].mxu0
    %532 = vmatprep.mubr.bf16.mxu0 0
    %533 = vmatmul.mubr.bf16.gmra.mrb[0].mxu0 %v468
    %v534 = vpop.f32.mrb[0].mxu0
    %v535 = vadd.f32 %v461, %v534
    %v536 = vpop.f32.mrb[0].mxu0
    %v537 = vpop.f32.mrb[0].mxu0
    %v538 = vadd.f32 %v461, %v537
    %v539 = vpop.f32.mrb[0].mxu0
    %540 = vmatprep.mubr.bf16.mxu0 0
    %541 = vmatmul.mubr.bf16.gmra.mrb[0].mxu0 %v471
    %v542 = vpop.f32.mrb[0].mxu0
    %v543 = vadd.f32 %v461, %v542
    %v544 = vpop.f32.mrb[0].mxu0
    %v545 = vpop.f32.mrb[0].mxu0
    %v546 = vadd.f32 %v461, %v545
    %v547 = vpop.f32.mrb[0].mxu0
    %548 = vmatprep.mubr.bf16.mxu0 0
    %549 = vmatmul.mubr.bf16.gmra.mrb[0].mxu0 %v474
    %v550 = vpop.f32.mrb[0].mxu0
    %v551 = vadd.f32 %v461, %v550
    %v552 = vpop.f32.mrb[0].mxu0
    %v553 = vpop.f32.mrb[0].mxu0
    %v554 = vadd.f32 %v461, %v553
    %v555 = vpop.f32.mrb[0].mxu0
    %556 = vmatprep.mubr.bf16.mxu0 0
    %557 = vmatmul.mubr.bf16.gmra.mrb[0].mxu0 %v477
    %v558 = vpop.f32.mrb[0].mxu0
    %v559 = vadd.f32 %v461, %v558
    %v560 = vpop.f32.mrb[0].mxu0
    %v561 = vpop.f32.mrb[0].mxu0
    %v562 = vadd.f32 %v461, %v561
    %v563 = vpop.f32.mrb[0].mxu0
    %564 = vmatprep.mubr.bf16.mxu0 0
    %565 = vmatmul.mubr.bf16.gmra.mrb[0].mxu0 %v480
    %v566 = vpop.f32.mrb[0].mxu0
    %v567 = vadd.f32 %v461, %v566
    %v568 = vpop.f32.mrb[0].mxu0
    %v569 = vpop.f32.mrb[0].mxu0
    %v570 = vadd.f32 %v461, %v569
    %v571 = vpop.f32.mrb[0].mxu0
    %572 = vmatprep.mubr.bf16.mxu0 0
    %573 = vmatmul.mubr.bf16.gmra.mrb[0].mxu0 %v483
    %v574 = vpop.f32.mrb[0].mxu0
    %v575 = vadd.f32 %v461, %v574
    %v576 = vpop.f32.mrb[0].mxu0
    %v577 = vpop.f32.mrb[0].mxu0
    %v578 = vadd.f32 %v461, %v577
    %v579 = vpop.f32.mrb[0].mxu0
    %580 = vmatprep.mubr.bf16.mxu0 0
    %581 = vmatmul.mubr.bf16.gmra.mrb[0].mxu0 %v486
    %v582 = vpop.f32.mrb[0].mxu0
    %v583 = vadd.f32 %v461, %v582
    %v584 = vpop.f32.mrb[0].mxu0
    %v585 = vpop.f32.mrb[0].mxu0
    %v586 = vadd.f32 %v461, %v585
    %v587 = vpop.f32.mrb[0].mxu0
    %588 = vdwg.mxu0
    %v589 = vmax.f32 %v527, 0.0
    %v590 = vmax.f32 %v530, 0.0
    %v591 = vmax.f32 %v535, 0.0
    %v592 = vmax.f32 %v538, 0.0
    %v593 = vmax.f32 %v543, 0.0
    %v594 = vmax.f32 %v546, 0.0
    %v595 = vmax.f32 %v551, 0.0
    %v596 = vmax.f32 %v554, 0.0
    %v597 = vmax.f32 %v559, 0.0
    %v598 = vmax.f32 %v562, 0.0
    %v599 = vmax.f32 %v567, 0.0
    %v600 = vmax.f32 %v570, 0.0
    %v601 = vmax.f32 %v575, 0.0
    %v602 = vmax.f32 %v578, 0.0
    %v603 = vmax.f32 %v583, 0.0
    %v604 = vmax.f32 %v586, 0.0
    %v605 = vpack.c.bf16 %v590, %v589
    %v606 = vpack.c.bf16 %v592, %v591
    %v607 = vpack.c.bf16 %v594, %v593
    %v608 = vpack.c.bf16 %v596, %v595
    %v609 = vpack.c.bf16 %v598, %v597
    %v610 = vpack.c.bf16 %v600, %v599
    %v611 = vpack.c.bf16 %v602, %v601
    %v612 = vpack.c.bf16 %v604, %v603
    %s613 = ssub.f32 %s123, 1.0
    %v614 = vstv %s613
    %v615 = vmul.f32 %v614, %v90
    %v616 = vmul.f32 %v614, %v91
    %v617 = vmul.f32 %v614, %v92
    %v618 = vmul.f32 %v614, %v93
    %v619 = vmul.f32 %v614, %v94
    %v620 = vmul.f32 %v614, %v95
    %v621 = vmul.f32 %v614, %v96
    %v622 = vmul.f32 %v614, %v97
    %v623 = vmul.f32 %v614, %v98
    %v624 = vmul.f32 %v614, %v99
    %v625 = vmul.f32 %v614, %v100
    %v626 = vmul.f32 %v614, %v101
    %v627 = vmul.f32 %v614, %v102
    %v628 = vmul.f32 %v614, %v103
    %v629 = vmul.f32 %v614, %v104
    %v630 = vmul.f32 %v614, %v105
    %632 = vset.pattern.permute.xlu0 0
    %633 = vperm.xlu0 %632, %v615
    %v634 = vpop.permute.xlu0 %633
    %637 = vset.pattern.permute.xlu0 0
    %638 = vperm.xlu0 %637, %v616
    %v639 = vpop.permute.xlu0 %638
    %642 = vset.pattern.permute.xlu0 0
    %643 = vperm.xlu0 %642, %v617
    %v644 = vpop.permute.xlu0 %643
    %647 = vset.pattern.permute.xlu0 0
    %648 = vperm.xlu0 %647, %v618
    %v649 = vpop.permute.xlu0 %648
    %652 = vset.pattern.permute.xlu0 0
    %653 = vperm.xlu0 %652, %v619
    %v654 = vpop.permute.xlu0 %653
    %657 = vset.pattern.permute.xlu0 0
    %658 = vperm.xlu0 %657, %v620
    %v659 = vpop.permute.xlu0 %658
    %662 = vset.pattern.permute.xlu0 0
    %663 = vperm.xlu0 %662, %v621
    %v664 = vpop.permute.xlu0 %663
    %667 = vset.pattern.permute.xlu0 0
    %668 = vperm.xlu0 %667, %v622
    %v669 = vpop.permute.xlu0 %668
    %672 = vset.pattern.permute.xlu0 0
    %673 = vperm.xlu0 %672, %v623
    %v674 = vpop.permute.xlu0 %673
    %677 = vset.pattern.permute.xlu0 0
    %678 = vperm.xlu0 %677, %v624
    %v679 = vpop.permute.xlu0 %678
    %682 = vset.pattern.permute.xlu0 0
    %683 = vperm.xlu0 %682, %v625
    %v684 = vpop.permute.xlu0 %683
    %687 = vset.pattern.permute.xlu0 0
    %688 = vperm.xlu0 %687, %v626
    %v689 = vpop.permute.xlu0 %688
    %692 = vset.pattern.permute.xlu0 0
    %693 = vperm.xlu0 %692, %v627
    %v694 = vpop.permute.xlu0 %693
    %697 = vset.pattern.permute.xlu0 0
    %698 = vperm.xlu0 %697, %v628
    %v699 = vpop.permute.xlu0 %698
    %702 = vset.pattern.permute.xlu0 0
    %703 = vperm.xlu0 %702, %v629
    %v704 = vpop.permute.xlu0 %703
    %707 = vset.pattern.permute.xlu0 0
    %708 = vperm.xlu0 %707, %v630
    %v709 = vpop.permute.xlu0 %708
    %v711 = vmul.f32 %v634, %v589
    %v712 = vmul.f32 %v639, %v590
    %v713 = vmul.f32 %v644, %v591
    %v714 = vmul.f32 %v649, %v592
    %v715 = vmul.f32 %v654, %v593
    %v716 = vmul.f32 %v659, %v594
    %v717 = vmul.f32 %v664, %v595
    %v718 = vmul.f32 %v669, %v596
    %v719 = vmul.f32 %v674, %v597
    %v720 = vmul.f32 %v679, %v598
    %v721 = vmul.f32 %v684, %v599
    %v722 = vmul.f32 %v689, %v600
    %v723 = vmul.f32 %v694, %v601
    %v724 = vmul.f32 %v699, %v602
    %v725 = vmul.f32 %v704, %v603
    %v726 = vmul.f32 %v709, %v604
    %727 = vmatprep.subr.bf16.mxu0 0
    %728 = vmatpush1.bf16.msra.mxu0 %v605
    %729 = vmatprep.subr.bf16.mxu0 0
    %730 = vmatpush1.bf16.msra.mxu0 %v606
    %731 = vmatprep.subr.bf16.mxu0 0
    %732 = vmatpush1.bf16.msra.mxu0 %v607
    %733 = vmatprep.subr.bf16.mxu0 0
    %734 = vmatpush1.bf16.msra.mxu0 %v608
    %735 = vmatprep.subr.bf16.mxu0 0
    %736 = vmatpush1.bf16.msra.mxu0 %v609
    %737 = vmatprep.subr.bf16.mxu0 0
    %738 = vmatpush1.bf16.msra.mxu0 %v610
    %739 = vmatprep.subr.bf16.mxu0 0
    %740 = vmatpush1.bf16.msra.mxu0 %v611
    %741 = vmatprep.subr.bf16.mxu0 0
    %742 = vmatpush1.bf16.msra.mxu0 %v612
    %743 = vmatprep.subr.bf16.mxu0 0
    %744 = vmatpush1.bf16.msra.mxu0 0
    %745 = vmatprep.subr.bf16.mxu0 0
    %746 = vmatpush1.bf16.msra.mxu0 0
    %747 = vmatprep.subr.bf16.mxu0 0
    %748 = vmatpush1.bf16.msra.mxu0 0
    %749 = vmatprep.subr.bf16.mxu0 0
    %750 = vmatpush1.bf16.msra.mxu0 0
    %751 = vmatprep.subr.bf16.mxu0 0
    %752 = vmatpush1.bf16.msra.mxu0 0
    %753 = vmatprep.subr.bf16.mxu0 0
    %754 = vmatpush1.bf16.msra.mxu0 0
    %755 = vmatprep.subr.bf16.mxu0 0
    %756 = vmatpush1.bf16.msra.mxu0 0
    %757 = vmatprep.subr.bf16.mxu0 0
    %758 = vmatpush1.bf16.msra.mxu0 0
    %759 = vmatprep.mubr.bf16.mxu0 0
    %760 = vmatmul.mubr.bf16.gmra.mrb[0].mxu0 %v286
    %v761 = vpop.f32.mrb[0].mxu0
    %v762 = vadd.f32 %v711, %v761
    %v763 = vpop.f32.mrb[0].mxu0
    %v764 = vpop.f32.mrb[0].mxu0
    %v765 = vadd.f32 %v712, %v764
    %v766 = vpop.f32.mrb[0].mxu0
    %767 = vmatprep.mubr.bf16.mxu0 0
    %768 = vmatmul.mubr.bf16.gmra.mrb[0].mxu0 %v287
    %v769 = vpop.f32.mrb[0].mxu0
    %v770 = vadd.f32 %v713, %v769
    %v771 = vpop.f32.mrb[0].mxu0
    %v772 = vpop.f32.mrb[0].mxu0
    %v773 = vadd.f32 %v714, %v772
    %v774 = vpop.f32.mrb[0].mxu0
    %775 = vmatprep.mubr.bf16.mxu0 0
    %776 = vmatmul.mubr.bf16.gmra.mrb[0].mxu0 %v288
    %v777 = vpop.f32.mrb[0].mxu0
    %v778 = vadd.f32 %v715, %v777
    %v779 = vpop.f32.mrb[0].mxu0
    %v780 = vpop.f32.mrb[0].mxu0
    %v781 = vadd.f32 %v716, %v780
    %v782 = vpop.f32.mrb[0].mxu0
    %783 = vmatprep.mubr.bf16.mxu0 0
    %784 = vmatmul.mubr.bf16.gmra.mrb[0].mxu0 %v289
    %v785 = vpop.f32.mrb[0].mxu0
    %v786 = vadd.f32 %v717, %v785
    %v787 = vpop.f32.mrb[0].mxu0
    %v788 = vpop.f32.mrb[0].mxu0
    %v789 = vadd.f32 %v718, %v788
    %v790 = vpop.f32.mrb[0].mxu0
    %791 = vmatprep.mubr.bf16.mxu0 0
    %792 = vmatmul.mubr.bf16.gmra.mrb[0].mxu0 %v290
    %v793 = vpop.f32.mrb[0].mxu0
    %v794 = vadd.f32 %v719, %v793
    %v795 = vpop.f32.mrb[0].mxu0
    %v796 = vpop.f32.mrb[0].mxu0
    %v797 = vadd.f32 %v720, %v796
    %v798 = vpop.f32.mrb[0].mxu0
    %799 = vmatprep.mubr.bf16.mxu0 0
    %800 = vmatmul.mubr.bf16.gmra.mrb[0].mxu0 %v291
    %v801 = vpop.f32.mrb[0].mxu0
    %v802 = vadd.f32 %v721, %v801
    %v803 = vpop.f32.mrb[0].mxu0
    %v804 = vpop.f32.mrb[0].mxu0
    %v805 = vadd.f32 %v722, %v804
    %v806 = vpop.f32.mrb[0].mxu0
    %807 = vmatprep.mubr.bf16.mxu0 0
    %808 = vmatmul.mubr.bf16.gmra.mrb[0].mxu0 %v292
    %v809 = vpop.f32.mrb[0].mxu0
    %v810 = vadd.f32 %v723, %v809
    %v811 = vpop.f32.mrb[0].mxu0
    %v812 = vpop.f32.mrb[0].mxu0
    %v813 = vadd.f32 %v724, %v812
    %v814 = vpop.f32.mrb[0].mxu0
    %815 = vmatprep.mubr.bf16.mxu0 0
    %816 = vmatmul.mubr.bf16.gmra.mrb[0].mxu0 %v293
    %v817 = vpop.f32.mrb[0].mxu0
    %v818 = vadd.f32 %v725, %v817
    %v819 = vpop.f32.mrb[0].mxu0
    %v820 = vpop.f32.mrb[0].mxu0
    %v821 = vadd.f32 %v726, %v820
    %v822 = vpop.f32.mrb[0].mxu0
    %823 = vdwg.mxu0
    %v824 = vpack.c.bf16 %v765, %v762
    %v825 = vpack.c.bf16 %v773, %v770
    %v826 = vpack.c.bf16 %v781, %v778
    %v827 = vpack.c.bf16 %v789, %v786
    %v828 = vpack.c.bf16 %v797, %v794
    %v829 = vpack.c.bf16 %v805, %v802
    %v830 = vpack.c.bf16 %v813, %v810
    %v831 = vpack.c.bf16 %v821, %v818
    %v832 = vld [vmem:[%s7] sm:$0xf]
    %v833 = vld [vmem:[%s7 + $0x4] sm:$0xf]
    %v834 = vld [vmem:[%s7 + $0x8] sm:$0xf]
    %v835 = vld [vmem:[%s7 + $0xc] sm:$0xf]
    %v836 = vld [vmem:[%s8] sm:$0x1]
    %v838 = vlaneseq
    %v839 = vshrl.u32 %v838, 7
    %v840 = vsub.s32 0, %v839
    %v841 = vrot.slane %v836, %v840
    %v847 = vunpack.c.l.b16 %v832
    %v848 = vunpack.c.l.b16 %v833
    %v849 = vunpack.c.l.b16 %v834
    %v850 = vunpack.c.l.b16 %v835
    %v851 = vpack.c.b16 %v848, %v847
    %v852 = vpack.c.b16 %v850, %v849
    %vm855 = vcmask 261120
    %v857 = vsel %vm855, %v824, 0
    %v860 = vsel %vm855, %v825, 0
    %v863 = vsel %vm855, %v826, 0
    %v866 = vsel %vm855, %v827, 0
    %v869 = vsel %vm855, %v828, 0
    %v872 = vsel %vm855, %v829, 0
    %v875 = vsel %vm855, %v830, 0
    %v878 = vsel %vm855, %v831, 0
    %880 = vmatprep.subr.bf16.mxu0 0
    %881 = vmatpush1.bf16.msra.mxu0 %v851
    %882 = vmatprep.subr.bf16.mxu0 0
    %883 = vmatpush1.bf16.msra.mxu0 %v852
    %884 = vmatprep.subr.bf16.mxu0 0
    %885 = vmatpush1.bf16.msra.mxu0 0
    %886 = vmatprep.subr.bf16.mxu0 0
    %887 = vmatpush1.bf16.msra.mxu0 0
    %888 = vmatprep.subr.bf16.mxu0 0
    %889 = vmatpush1.bf16.msra.mxu0 0
    %890 = vmatprep.subr.bf16.mxu0 0
    %891 = vmatpush1.bf16.msra.mxu0 0
    %892 = vmatprep.subr.bf16.mxu0 0
    %893 = vmatpush1.bf16.msra.mxu0 0
    %894 = vmatprep.subr.bf16.mxu0 0
    %895 = vmatpush1.bf16.msra.mxu0 0
    %896 = vmatprep.subr.bf16.mxu0 0
    %897 = vmatpush1.bf16.msra.mxu0 0
    %898 = vmatprep.subr.bf16.mxu0 0
    %899 = vmatpush1.bf16.msra.mxu0 0
    %900 = vmatprep.subr.bf16.mxu0 0
    %901 = vmatpush1.bf16.msra.mxu0 0
    %902 = vmatprep.subr.bf16.mxu0 0
    %903 = vmatpush1.bf16.msra.mxu0 0
    %904 = vmatprep.subr.bf16.mxu0 0
    %905 = vmatpush1.bf16.msra.mxu0 0
    %906 = vmatprep.subr.bf16.mxu0 0
    %907 = vmatpush1.bf16.msra.mxu0 0
    %908 = vmatprep.subr.bf16.mxu0 0
    %909 = vmatpush1.bf16.msra.mxu0 0
    %910 = vmatprep.subr.bf16.mxu0 0
    %911 = vmatpush1.bf16.msra.mxu0 0
    %912 = vmatprep.mubr.bf16.mxu0 0
    %913 = vmatmul.mubr.bf16.gmra.mrb[0].mxu0 %v857
    %v914 = vpop.f32.mrb[0].mxu0
    %v915 = vadd.f32 %v841, %v914
    %v916 = vpop.f32.mrb[0].mxu0
    %v917 = vpop.f32.mrb[0].mxu0
    %v918 = vadd.f32 %v841, %v917
    %v919 = vpop.f32.mrb[0].mxu0
    %920 = vmatprep.mubr.bf16.mxu0 0
    %921 = vmatmul.mubr.bf16.gmra.mrb[0].mxu0 %v860
    %v922 = vpop.f32.mrb[0].mxu0
    %v923 = vadd.f32 %v841, %v922
    %v924 = vpop.f32.mrb[0].mxu0
    %v925 = vpop.f32.mrb[0].mxu0
    %v926 = vadd.f32 %v841, %v925
    %v927 = vpop.f32.mrb[0].mxu0
    %928 = vmatprep.mubr.bf16.mxu0 0
    %929 = vmatmul.mubr.bf16.gmra.mrb[0].mxu0 %v863
    %v930 = vpop.f32.mrb[0].mxu0
    %v931 = vadd.f32 %v841, %v930
    %v932 = vpop.f32.mrb[0].mxu0
    %v933 = vpop.f32.mrb[0].mxu0
    %v934 = vadd.f32 %v841, %v933
    %v935 = vpop.f32.mrb[0].mxu0
    %936 = vmatprep.mubr.bf16.mxu0 0
    %937 = vmatmul.mubr.bf16.gmra.mrb[0].mxu0 %v866
    %v938 = vpop.f32.mrb[0].mxu0
    %v939 = vadd.f32 %v841, %v938
    %v940 = vpop.f32.mrb[0].mxu0
    %v941 = vpop.f32.mrb[0].mxu0
    %v942 = vadd.f32 %v841, %v941
    %v943 = vpop.f32.mrb[0].mxu0
    %944 = vmatprep.mubr.bf16.mxu0 0
    %945 = vmatmul.mubr.bf16.gmra.mrb[0].mxu0 %v869
    %v946 = vpop.f32.mrb[0].mxu0
    %v947 = vadd.f32 %v841, %v946
    %v948 = vpop.f32.mrb[0].mxu0
    %v949 = vpop.f32.mrb[0].mxu0
    %v950 = vadd.f32 %v841, %v949
    %v951 = vpop.f32.mrb[0].mxu0
    %952 = vmatprep.mubr.bf16.mxu0 0
    %953 = vmatmul.mubr.bf16.gmra.mrb[0].mxu0 %v872
    %v954 = vpop.f32.mrb[0].mxu0
    %v955 = vadd.f32 %v841, %v954
    %v956 = vpop.f32.mrb[0].mxu0
    %v957 = vpop.f32.mrb[0].mxu0
    %v958 = vadd.f32 %v841, %v957
    %v959 = vpop.f32.mrb[0].mxu0
    %960 = vmatprep.mubr.bf16.mxu0 0
    %961 = vmatmul.mubr.bf16.gmra.mrb[0].mxu0 %v875
    %v962 = vpop.f32.mrb[0].mxu0
    %v963 = vadd.f32 %v841, %v962
    %v964 = vpop.f32.mrb[0].mxu0
    %v965 = vpop.f32.mrb[0].mxu0
    %v966 = vadd.f32 %v841, %v965
    %v967 = vpop.f32.mrb[0].mxu0
    %968 = vmatprep.mubr.bf16.mxu0 0
    %969 = vmatmul.mubr.bf16.gmra.mrb[0].mxu0 %v878
    %v970 = vpop.f32.mrb[0].mxu0
    %v971 = vadd.f32 %v841, %v970
    %v972 = vpop.f32.mrb[0].mxu0
    %v973 = vpop.f32.mrb[0].mxu0
    %v974 = vadd.f32 %v841, %v973
    %v975 = vpop.f32.mrb[0].mxu0
    %976 = vdwg.mxu0
    %v977 = vmax.f32 %v915, 0.0
    %v978 = vmax.f32 %v918, 0.0
    %v979 = vmax.f32 %v923, 0.0
    %v980 = vmax.f32 %v926, 0.0
    %v981 = vmax.f32 %v931, 0.0
    %v982 = vmax.f32 %v934, 0.0
    %v983 = vmax.f32 %v939, 0.0
    %v984 = vmax.f32 %v942, 0.0
    %v985 = vmax.f32 %v947, 0.0
    %v986 = vmax.f32 %v950, 0.0
    %v987 = vmax.f32 %v955, 0.0
    %v988 = vmax.f32 %v958, 0.0
    %v989 = vmax.f32 %v963, 0.0
    %v990 = vmax.f32 %v966, 0.0
    %v991 = vmax.f32 %v971, 0.0
    %v992 = vmax.f32 %v974, 0.0
    %v993 = vld [vmem:[%s9] sm:$0xff]
    %v994 = vld [vmem:[%s10] sm:$0xff]
    %v995 = vld [vmem:[%s10 + $0x8] sm:$0xff]
    %v996 = vld [vmem:[%s10 + $0x10] sm:$0xff]
    %v997 = vld [vmem:[%s10 + $0x18] sm:$0xff]
    %v999 = vsel %vm855, %v589, 0
    %v1002 = vsel %vm855, %v590, 0
    %v1005 = vsel %vm855, %v591, 0
    %v1008 = vsel %vm855, %v592, 0
    %v1011 = vsel %vm855, %v593, 0
    %v1014 = vsel %vm855, %v594, 0
    %v1017 = vsel %vm855, %v595, 0
    %v1020 = vsel %vm855, %v596, 0
    %v1023 = vsel %vm855, %v597, 0
    %v1026 = vsel %vm855, %v598, 0
    %v1029 = vsel %vm855, %v599, 0
    %v1032 = vsel %vm855, %v600, 0
    %v1035 = vsel %vm855, %v601, 0
    %v1038 = vsel %vm855, %v602, 0
    %v1041 = vsel %vm855, %v603, 0
    %v1044 = vsel %vm855, %v604, 0
    %1046 = vmatprep.subr.mxu0 0.0
    %1047 = vmatpush1.msra.mxu0 %v994
    %1048 = vmatprep.subr.mxu0 0.0
    %1049 = vmatpush1.msra.mxu0 %v995
    %1050 = vmatprep.subr.mxu0 0.0
    %1051 = vmatpush1.msra.mxu0 %v996
    %1052 = vmatprep.subr.mxu0 0.0
    %1053 = vmatpush1.msra.mxu0 %v997
    %1054 = vmatprep.subr.mxu0 0.0
    %1055 = vmatpush1.msra.mxu0 0.0
    %1056 = vmatprep.subr.mxu0 0.0
    %1057 = vmatpush1.msra.mxu0 0.0
    %1058 = vmatprep.subr.mxu0 0.0
    %1059 = vmatpush1.msra.mxu0 0.0
    %1060 = vmatprep.subr.mxu0 0.0
    %1061 = vmatpush1.msra.mxu0 0.0
    %1062 = vmatprep.subr.mxu0 0.0
    %1063 = vmatpush1.msra.mxu0 0.0
    %1064 = vmatprep.subr.mxu0 0.0
    %1065 = vmatpush1.msra.mxu0 0.0
    %1066 = vmatprep.subr.mxu0 0.0
    %1067 = vmatpush1.msra.mxu0 0.0
    %1068 = vmatprep.subr.mxu0 0.0
    %1069 = vmatpush1.msra.mxu0 0.0
    %1070 = vmatprep.subr.mxu0 0.0
    %1071 = vmatpush1.msra.mxu0 0.0
    %1072 = vmatprep.subr.mxu0 0.0
    %1073 = vmatpush1.msra.mxu0 0.0
    %1074 = vmatprep.subr.mxu0 0.0
    %1075 = vmatpush1.msra.mxu0 0.0
    %1076 = vmatprep.subr.mxu0 0.0
    %1077 = vmatpush1.msra.mxu0 0.0
    %1078 = vmatprep.subr.mxu0 0.0
    %1079 = vmatpush1.msra.mxu0 0.0
    %1080 = vmatprep.subr.mxu0 0.0
    %1081 = vmatpush1.msra.mxu0 0.0
    %1082 = vmatprep.subr.mxu0 0.0
    %1083 = vmatpush1.msra.mxu0 0.0
    %1084 = vmatprep.subr.mxu0 0.0
    %1085 = vmatpush1.msra.mxu0 0.0
    %1086 = vmatprep.subr.mxu0 0.0
    %1087 = vmatpush1.msra.mxu0 0.0
    %1088 = vmatprep.subr.mxu0 0.0
    %1089 = vmatpush1.msra.mxu0 0.0
    %1090 = vmatprep.subr.mxu0 0.0
    %1091 = vmatpush1.msra.mxu0 0.0
    %1092 = vmatprep.subr.mxu0 0.0
    %1093 = vmatpush1.msra.mxu0 0.0
    %1094 = vmatprep.subr.mxu0 0.0
    %1095 = vmatpush1.msra.mxu0 0.0
    %1096 = vmatprep.subr.mxu0 0.0
    %1097 = vmatpush1.msra.mxu0 0.0
    %1098 = vmatprep.subr.mxu0 0.0
    %1099 = vmatpush1.msra.mxu0 0.0
    %1100 = vmatprep.subr.mxu0 0.0
    %1101 = vmatpush1.msra.mxu0 0.0
    %1102 = vmatprep.subr.mxu0 0.0
    %1103 = vmatpush1.msra.mxu0 0.0
    %1104 = vmatprep.subr.mxu0 0.0
    %1105 = vmatpush1.msra.mxu0 0.0
    %1106 = vmatprep.subr.mxu0 0.0
    %1107 = vmatpush1.msra.mxu0 0.0
    %1108 = vmatprep.subr.mxu0 0.0
    %1109 = vmatpush1.msra.mxu0 0.0
    %1110 = vmatprep.mubr.f32.mxu0 0.0
    %1111 = vmatmul.mubr.f32.gmra.mrb[0].mxu0 %v999
    %v1112 = vpop.f32.mrb[0].mxu0
    %v1113 = vadd.f32 0.0, %v1112
    %v1114 = vpop.f32.mrb[0].mxu0
    %1115 = vmatprep.mubr.f32.mxu0 0.0
    %1116 = vmatmul.mubr.f32.gmra.mrb[0].mxu0 %v1002
    %v1117 = vpop.f32.mrb[0].mxu0
    %v1118 = vadd.f32 0.0, %v1117
    %v1119 = vpop.f32.mrb[0].mxu0
    %1120 = vmatprep.mubr.f32.mxu0 0.0
    %1121 = vmatmul.mubr.f32.gmra.mrb[0].mxu0 %v1005
    %v1122 = vpop.f32.mrb[0].mxu0
    %v1123 = vadd.f32 0.0, %v1122
    %v1124 = vpop.f32.mrb[0].mxu0
    %1125 = vmatprep.mubr.f32.mxu0 0.0
    %1126 = vmatmul.mubr.f32.gmra.mrb[0].mxu0 %v1008
    %v1127 = vpop.f32.mrb[0].mxu0
    %v1128 = vadd.f32 0.0, %v1127
    %v1129 = vpop.f32.mrb[0].mxu0
    %1130 = vmatprep.mubr.f32.mxu0 0.0
    %1131 = vmatmul.mubr.f32.gmra.mrb[0].mxu0 %v1011
    %v1132 = vpop.f32.mrb[0].mxu0
    %v1133 = vadd.f32 0.0, %v1132
    %v1134 = vpop.f32.mrb[0].mxu0
    %1135 = vmatprep.mubr.f32.mxu0 0.0
    %1136 = vmatmul.mubr.f32.gmra.mrb[0].mxu0 %v1014
    %v1137 = vpop.f32.mrb[0].mxu0
    %v1138 = vadd.f32 0.0, %v1137
    %v1139 = vpop.f32.mrb[0].mxu0
    %1140 = vmatprep.mubr.f32.mxu0 0.0
    %1141 = vmatmul.mubr.f32.gmra.mrb[0].mxu0 %v1017
    %v1142 = vpop.f32.mrb[0].mxu0
    %v1143 = vadd.f32 0.0, %v1142
    %v1144 = vpop.f32.mrb[0].mxu0
    %1145 = vmatprep.mubr.f32.mxu0 0.0
    %1146 = vmatmul.mubr.f32.gmra.mrb[0].mxu0 %v1020
    %v1147 = vpop.f32.mrb[0].mxu0
    %v1148 = vadd.f32 0.0, %v1147
    %v1149 = vpop.f32.mrb[0].mxu0
    %1150 = vmatprep.mubr.f32.mxu0 0.0
    %1151 = vmatmul.mubr.f32.gmra.mrb[0].mxu0 %v1023
    %v1152 = vpop.f32.mrb[0].mxu0
    %v1153 = vadd.f32 0.0, %v1152
    %v1154 = vpop.f32.mrb[0].mxu0
    %1155 = vmatprep.mubr.f32.mxu0 0.0
    %1156 = vmatmul.mubr.f32.gmra.mrb[0].mxu0 %v1026
    %v1157 = vpop.f32.mrb[0].mxu0
    %v1158 = vadd.f32 0.0, %v1157
    %v1159 = vpop.f32.mrb[0].mxu0
    %1160 = vmatprep.mubr.f32.mxu0 0.0
    %1161 = vmatmul.mubr.f32.gmra.mrb[0].mxu0 %v1029
    %v1162 = vpop.f32.mrb[0].mxu0
    %v1163 = vadd.f32 0.0, %v1162
    %v1164 = vpop.f32.mrb[0].mxu0
    %1165 = vmatprep.mubr.f32.mxu0 0.0
    %1166 = vmatmul.mubr.f32.gmra.mrb[0].mxu0 %v1032
    %v1167 = vpop.f32.mrb[0].mxu0
    %v1168 = vadd.f32 0.0, %v1167
    %v1169 = vpop.f32.mrb[0].mxu0
    %1170 = vmatprep.mubr.f32.mxu0 0.0
    %1171 = vmatmul.mubr.f32.gmra.mrb[0].mxu0 %v1035
    %v1172 = vpop.f32.mrb[0].mxu0
    %v1173 = vadd.f32 0.0, %v1172
    %v1174 = vpop.f32.mrb[0].mxu0
    %1175 = vmatprep.mubr.f32.mxu0 0.0
    %1176 = vmatmul.mubr.f32.gmra.mrb[0].mxu0 %v1038
    %v1177 = vpop.f32.mrb[0].mxu0
    %v1178 = vadd.f32 0.0, %v1177
    %v1179 = vpop.f32.mrb[0].mxu0
    %1180 = vmatprep.mubr.f32.mxu0 0.0
    %1181 = vmatmul.mubr.f32.gmra.mrb[0].mxu0 %v1041
    %v1182 = vpop.f32.mrb[0].mxu0
    %v1183 = vadd.f32 0.0, %v1182
    %v1184 = vpop.f32.mrb[0].mxu0
    %1185 = vmatprep.mubr.f32.mxu0 0.0
    %1186 = vmatmul.mubr.f32.gmra.mrb[0].mxu0 %v1044
    %v1187 = vpop.f32.mrb[0].mxu0
    %v1188 = vadd.f32 0.0, %v1187
    %v1189 = vpop.f32.mrb[0].mxu0
    %1190 = vdwg.mxu0
    %v1192 = vsel %vm463, %v124, 0
    %v1195 = vsel %vm463, %v125, 0
    %v1198 = vsel %vm463, %v126, 0
    %v1201 = vsel %vm463, %v127, 0
    %v1204 = vsel %vm463, %v128, 0
    %v1207 = vsel %vm463, %v129, 0
    %v1210 = vsel %vm463, %v130, 0
    %v1213 = vsel %vm463, %v131, 0
    %v1216 = vsel %vm463, %v132, 0
    %v1219 = vsel %vm463, %v133, 0
    %v1222 = vsel %vm463, %v134, 0
    %v1225 = vsel %vm463, %v135, 0
    %v1228 = vsel %vm463, %v136, 0
    %v1231 = vsel %vm463, %v137, 0
    %v1234 = vsel %vm463, %v138, 0
    %v1237 = vsel %vm463, %v139, 0
    %1239 = vmatprep.subr.mxu0 0.0
    %1240 = vmatpush1.msra.mxu0 %v993
    %1241 = vmatprep.subr.mxu0 0.0
    %1242 = vmatpush1.msra.mxu0 0.0
    %1243 = vmatprep.subr.mxu0 0.0
    %1244 = vmatpush1.msra.mxu0 0.0
    %1245 = vmatprep.subr.mxu0 0.0
    %1246 = vmatpush1.msra.mxu0 0.0
    %1247 = vmatprep.subr.mxu0 0.0
    %1248 = vmatpush1.msra.mxu0 0.0
    %1249 = vmatprep.subr.mxu0 0.0
    %1250 = vmatpush1.msra.mxu0 0.0
    %1251 = vmatprep.subr.mxu0 0.0
    %1252 = vmatpush1.msra.mxu0 0.0
    %1253 = vmatprep.subr.mxu0 0.0
    %1254 = vmatpush1.msra.mxu0 0.0
    %1255 = vmatprep.subr.mxu0 0.0
    %1256 = vmatpush1.msra.mxu0 0.0
    %1257 = vmatprep.subr.mxu0 0.0
    %1258 = vmatpush1.msra.mxu0 0.0
    %1259 = vmatprep.subr.mxu0 0.0
    %1260 = vmatpush1.msra.mxu0 0.0
    %1261 = vmatprep.subr.mxu0 0.0
    %1262 = vmatpush1.msra.mxu0 0.0
    %1263 = vmatprep.subr.mxu0 0.0
    %1264 = vmatpush1.msra.mxu0 0.0
    %1265 = vmatprep.subr.mxu0 0.0
    %1266 = vmatpush1.msra.mxu0 0.0
    %1267 = vmatprep.subr.mxu0 0.0
    %1268 = vmatpush1.msra.mxu0 0.0
    %1269 = vmatprep.subr.mxu0 0.0
    %1270 = vmatpush1.msra.mxu0 0.0
    %1271 = vmatprep.subr.mxu0 0.0
    %1272 = vmatpush1.msra.mxu0 0.0
    %1273 = vmatprep.subr.mxu0 0.0
    %1274 = vmatpush1.msra.mxu0 0.0
    %1275 = vmatprep.subr.mxu0 0.0
    %1276 = vmatpush1.msra.mxu0 0.0
    %1277 = vmatprep.subr.mxu0 0.0
    %1278 = vmatpush1.msra.mxu0 0.0
    %1279 = vmatprep.subr.mxu0 0.0
    %1280 = vmatpush1.msra.mxu0 0.0
    %1281 = vmatprep.subr.mxu0 0.0
    %1282 = vmatpush1.msra.mxu0 0.0
    %1283 = vmatprep.subr.mxu0 0.0
    %1284 = vmatpush1.msra.mxu0 0.0
    %1285 = vmatprep.subr.mxu0 0.0
    %1286 = vmatpush1.msra.mxu0 0.0
    %1287 = vmatprep.subr.mxu0 0.0
    %1288 = vmatpush1.msra.mxu0 0.0
    %1289 = vmatprep.subr.mxu0 0.0
    %1290 = vmatpush1.msra.mxu0 0.0
    %1291 = vmatprep.subr.mxu0 0.0
    %1292 = vmatpush1.msra.mxu0 0.0
    %1293 = vmatprep.subr.mxu0 0.0
    %1294 = vmatpush1.msra.mxu0 0.0
    %1295 = vmatprep.subr.mxu0 0.0
    %1296 = vmatpush1.msra.mxu0 0.0
    %1297 = vmatprep.subr.mxu0 0.0
    %1298 = vmatpush1.msra.mxu0 0.0
    %1299 = vmatprep.subr.mxu0 0.0
    %1300 = vmatpush1.msra.mxu0 0.0
    %1301 = vmatprep.subr.mxu0 0.0
    %1302 = vmatpush1.msra.mxu0 0.0
    %1303 = vmatprep.mubr.f32.mxu0 0.0
    %1304 = vmatmul.mubr.f32.gmra.mrb[0].mxu0 %v1192
    %v1305 = vpop.f32.mrb[0].mxu0
    %v1306 = vadd.f32 %v1113, %v1305
    %v1307 = vpop.f32.mrb[0].mxu0
    %1308 = vmatprep.mubr.f32.mxu0 0.0
    %1309 = vmatmul.mubr.f32.gmra.mrb[0].mxu0 %v1195
    %v1310 = vpop.f32.mrb[0].mxu0
    %v1311 = vadd.f32 %v1118, %v1310
    %v1312 = vpop.f32.mrb[0].mxu0
    %1313 = vmatprep.mubr.f32.mxu0 0.0
    %1314 = vmatmul.mubr.f32.gmra.mrb[0].mxu0 %v1198
    %v1315 = vpop.f32.mrb[0].mxu0
    %v1316 = vadd.f32 %v1123, %v1315
    %v1317 = vpop.f32.mrb[0].mxu0
    %1318 = vmatprep.mubr.f32.mxu0 0.0
    %1319 = vmatmul.mubr.f32.gmra.mrb[0].mxu0 %v1201
    %v1320 = vpop.f32.mrb[0].mxu0
    %v1321 = vadd.f32 %v1128, %v1320
    %v1322 = vpop.f32.mrb[0].mxu0
    %1323 = vmatprep.mubr.f32.mxu0 0.0
    %1324 = vmatmul.mubr.f32.gmra.mrb[0].mxu0 %v1204
    %v1325 = vpop.f32.mrb[0].mxu0
    %v1326 = vadd.f32 %v1133, %v1325
    %v1327 = vpop.f32.mrb[0].mxu0
    %1328 = vmatprep.mubr.f32.mxu0 0.0
    %1329 = vmatmul.mubr.f32.gmra.mrb[0].mxu0 %v1207
    %v1330 = vpop.f32.mrb[0].mxu0
    %v1331 = vadd.f32 %v1138, %v1330
    %v1332 = vpop.f32.mrb[0].mxu0
    %1333 = vmatprep.mubr.f32.mxu0 0.0
    %1334 = vmatmul.mubr.f32.gmra.mrb[0].mxu0 %v1210
    %v1335 = vpop.f32.mrb[0].mxu0
    %v1336 = vadd.f32 %v1143, %v1335
    %v1337 = vpop.f32.mrb[0].mxu0
    %1338 = vmatprep.mubr.f32.mxu0 0.0
    %1339 = vmatmul.mubr.f32.gmra.mrb[0].mxu0 %v1213
    %v1340 = vpop.f32.mrb[0].mxu0
    %v1341 = vadd.f32 %v1148, %v1340
    %v1342 = vpop.f32.mrb[0].mxu0
    %1343 = vmatprep.mubr.f32.mxu0 0.0
    %1344 = vmatmul.mubr.f32.gmra.mrb[0].mxu0 %v1216
    %v1345 = vpop.f32.mrb[0].mxu0
    %v1346 = vadd.f32 %v1153, %v1345
    %v1347 = vpop.f32.mrb[0].mxu0
    %1348 = vmatprep.mubr.f32.mxu0 0.0
    %1349 = vmatmul.mubr.f32.gmra.mrb[0].mxu0 %v1219
    %v1350 = vpop.f32.mrb[0].mxu0
    %v1351 = vadd.f32 %v1158, %v1350
    %v1352 = vpop.f32.mrb[0].mxu0
    %1353 = vmatprep.mubr.f32.mxu0 0.0
    %1354 = vmatmul.mubr.f32.gmra.mrb[0].mxu0 %v1222
    %v1355 = vpop.f32.mrb[0].mxu0
    %v1356 = vadd.f32 %v1163, %v1355
    %v1357 = vpop.f32.mrb[0].mxu0
    %1358 = vmatprep.mubr.f32.mxu0 0.0
    %1359 = vmatmul.mubr.f32.gmra.mrb[0].mxu0 %v1225
    %v1360 = vpop.f32.mrb[0].mxu0
    %v1361 = vadd.f32 %v1168, %v1360
    %v1362 = vpop.f32.mrb[0].mxu0
    %1363 = vmatprep.mubr.f32.mxu0 0.0
    %1364 = vmatmul.mubr.f32.gmra.mrb[0].mxu0 %v1228
    %v1365 = vpop.f32.mrb[0].mxu0
    %v1366 = vadd.f32 %v1173, %v1365
    %v1367 = vpop.f32.mrb[0].mxu0
    %1368 = vmatprep.mubr.f32.mxu0 0.0
    %1369 = vmatmul.mubr.f32.gmra.mrb[0].mxu0 %v1231
    %v1370 = vpop.f32.mrb[0].mxu0
    %v1371 = vadd.f32 %v1178, %v1370
    %v1372 = vpop.f32.mrb[0].mxu0
    %1373 = vmatprep.mubr.f32.mxu0 0.0
    %1374 = vmatmul.mubr.f32.gmra.mrb[0].mxu0 %v1234
    %v1375 = vpop.f32.mrb[0].mxu0
    %v1376 = vadd.f32 %v1183, %v1375
    %v1377 = vpop.f32.mrb[0].mxu0
    %1378 = vmatprep.mubr.f32.mxu0 0.0
    %1379 = vmatmul.mubr.f32.gmra.mrb[0].mxu0 %v1237
    %v1380 = vpop.f32.mrb[0].mxu0
    %v1381 = vadd.f32 %v1188, %v1380
    %v1382 = vpop.f32.mrb[0].mxu0
    %1383 = vdwg.mxu0
    %v1384 = vld [vmem:[%s11] sm:$0xff]
    %v1385 = vld [vmem:[%s11 + $0x8] sm:$0xff]
    %v1386 = vld [vmem:[%s11 + $0x10] sm:$0xff]
    %v1387 = vld [vmem:[%s11 + $0x18] sm:$0xff]
    %v1389 = vsel %vm855, %v977, 0
    %v1392 = vsel %vm855, %v978, 0
    %v1395 = vsel %vm855, %v979, 0
    %v1398 = vsel %vm855, %v980, 0
    %v1401 = vsel %vm855, %v981, 0
    %v1404 = vsel %vm855, %v982, 0
    %v1407 = vsel %vm855, %v983, 0
    %v1410 = vsel %vm855, %v984, 0
    %v1413 = vsel %vm855, %v985, 0
    %v1416 = vsel %vm855, %v986, 0
    %v1419 = vsel %vm855, %v987, 0
    %v1422 = vsel %vm855, %v988, 0
    %v1425 = vsel %vm855, %v989, 0
    %v1428 = vsel %vm855, %v990, 0
    %v1431 = vsel %vm855, %v991, 0
    %v1434 = vsel %vm855, %v992, 0
    %1436 = vmatprep.subr.mxu0 0.0
    %1437 = vmatpush1.msra.mxu0 %v1384
    %1438 = vmatprep.subr.mxu0 0.0
    %1439 = vmatpush1.msra.mxu0 %v1385
    %1440 = vmatprep.subr.mxu0 0.0
    %1441 = vmatpush1.msra.mxu0 %v1386
    %1442 = vmatprep.subr.mxu0 0.0
    %1443 = vmatpush1.msra.mxu0 %v1387
    %1444 = vmatprep.subr.mxu0 0.0
    %1445 = vmatpush1.msra.mxu0 0.0
    %1446 = vmatprep.subr.mxu0 0.0
    %1447 = vmatpush1.msra.mxu0 0.0
    %1448 = vmatprep.subr.mxu0 0.0
    %1449 = vmatpush1.msra.mxu0 0.0
    %1450 = vmatprep.subr.mxu0 0.0
    %1451 = vmatpush1.msra.mxu0 0.0
    %1452 = vmatprep.subr.mxu0 0.0
    %1453 = vmatpush1.msra.mxu0 0.0
    %1454 = vmatprep.subr.mxu0 0.0
    %1455 = vmatpush1.msra.mxu0 0.0
    %1456 = vmatprep.subr.mxu0 0.0
    %1457 = vmatpush1.msra.mxu0 0.0
    %1458 = vmatprep.subr.mxu0 0.0
    %1459 = vmatpush1.msra.mxu0 0.0
    %1460 = vmatprep.subr.mxu0 0.0
    %1461 = vmatpush1.msra.mxu0 0.0
    %1462 = vmatprep.subr.mxu0 0.0
    %1463 = vmatpush1.msra.mxu0 0.0
    %1464 = vmatprep.subr.mxu0 0.0
    %1465 = vmatpush1.msra.mxu0 0.0
    %1466 = vmatprep.subr.mxu0 0.0
    %1467 = vmatpush1.msra.mxu0 0.0
    %1468 = vmatprep.subr.mxu0 0.0
    %1469 = vmatpush1.msra.mxu0 0.0
    %1470 = vmatprep.subr.mxu0 0.0
    %1471 = vmatpush1.msra.mxu0 0.0
    %1472 = vmatprep.subr.mxu0 0.0
    %1473 = vmatpush1.msra.mxu0 0.0
    %1474 = vmatprep.subr.mxu0 0.0
    %1475 = vmatpush1.msra.mxu0 0.0
    %1476 = vmatprep.subr.mxu0 0.0
    %1477 = vmatpush1.msra.mxu0 0.0
    %1478 = vmatprep.subr.mxu0 0.0
    %1479 = vmatpush1.msra.mxu0 0.0
    %1480 = vmatprep.subr.mxu0 0.0
    %1481 = vmatpush1.msra.mxu0 0.0
    %1482 = vmatprep.subr.mxu0 0.0
    %1483 = vmatpush1.msra.mxu0 0.0
    %1484 = vmatprep.subr.mxu0 0.0
    %1485 = vmatpush1.msra.mxu0 0.0
    %1486 = vmatprep.subr.mxu0 0.0
    %1487 = vmatpush1.msra.mxu0 0.0
    %1488 = vmatprep.subr.mxu0 0.0
    %1489 = vmatpush1.msra.mxu0 0.0
    %1490 = vmatprep.subr.mxu0 0.0
    %1491 = vmatpush1.msra.mxu0 0.0
    %1492 = vmatprep.subr.mxu0 0.0
    %1493 = vmatpush1.msra.mxu0 0.0
    %1494 = vmatprep.subr.mxu0 0.0
    %1495 = vmatpush1.msra.mxu0 0.0
    %1496 = vmatprep.subr.mxu0 0.0
    %1497 = vmatpush1.msra.mxu0 0.0
    %1498 = vmatprep.subr.mxu0 0.0
    %1499 = vmatpush1.msra.mxu0 0.0
    %1500 = vmatprep.mubr.f32.mxu0 0.0
    %1501 = vmatmul.mubr.f32.gmra.mrb[0].mxu0 %v1389
    %v1502 = vpop.f32.mrb[0].mxu0
    %v1503 = vadd.f32 0.0, %v1502
    %v1504 = vpop.f32.mrb[0].mxu0
    %1505 = vmatprep.mubr.f32.mxu0 0.0
    %1506 = vmatmul.mubr.f32.gmra.mrb[0].mxu0 %v1392
    %v1507 = vpop.f32.mrb[0].mxu0
    %v1508 = vadd.f32 0.0, %v1507
    %v1509 = vpop.f32.mrb[0].mxu0
    %1510 = vmatprep.mubr.f32.mxu0 0.0
    %1511 = vmatmul.mubr.f32.gmra.mrb[0].mxu0 %v1395
    %v1512 = vpop.f32.mrb[0].mxu0
    %v1513 = vadd.f32 0.0, %v1512
    %v1514 = vpop.f32.mrb[0].mxu0
    %1515 = vmatprep.mubr.f32.mxu0 0.0
    %1516 = vmatmul.mubr.f32.gmra.mrb[0].mxu0 %v1398
    %v1517 = vpop.f32.mrb[0].mxu0
    %v1518 = vadd.f32 0.0, %v1517
    %v1519 = vpop.f32.mrb[0].mxu0
    %1520 = vmatprep.mubr.f32.mxu0 0.0
    %1521 = vmatmul.mubr.f32.gmra.mrb[0].mxu0 %v1401
    %v1522 = vpop.f32.mrb[0].mxu0
    %v1523 = vadd.f32 0.0, %v1522
    %v1524 = vpop.f32.mrb[0].mxu0
    %1525 = vmatprep.mubr.f32.mxu0 0.0
    %1526 = vmatmul.mubr.f32.gmra.mrb[0].mxu0 %v1404
    %v1527 = vpop.f32.mrb[0].mxu0
    %v1528 = vadd.f32 0.0, %v1527
    %v1529 = vpop.f32.mrb[0].mxu0
    %1530 = vmatprep.mubr.f32.mxu0 0.0
    %1531 = vmatmul.mubr.f32.gmra.mrb[0].mxu0 %v1407
    %v1532 = vpop.f32.mrb[0].mxu0
    %v1533 = vadd.f32 0.0, %v1532
    %v1534 = vpop.f32.mrb[0].mxu0
    %1535 = vmatprep.mubr.f32.mxu0 0.0
    %1536 = vmatmul.mubr.f32.gmra.mrb[0].mxu0 %v1410
    %v1537 = vpop.f32.mrb[0].mxu0
    %v1538 = vadd.f32 0.0, %v1537
    %v1539 = vpop.f32.mrb[0].mxu0
    %1540 = vmatprep.mubr.f32.mxu0 0.0
    %1541 = vmatmul.mubr.f32.gmra.mrb[0].mxu0 %v1413
    %v1542 = vpop.f32.mrb[0].mxu0
    %v1543 = vadd.f32 0.0, %v1542
    %v1544 = vpop.f32.mrb[0].mxu0
    %1545 = vmatprep.mubr.f32.mxu0 0.0
    %1546 = vmatmul.mubr.f32.gmra.mrb[0].mxu0 %v1416
    %v1547 = vpop.f32.mrb[0].mxu0
    %v1548 = vadd.f32 0.0, %v1547
    %v1549 = vpop.f32.mrb[0].mxu0
    %1550 = vmatprep.mubr.f32.mxu0 0.0
    %1551 = vmatmul.mubr.f32.gmra.mrb[0].mxu0 %v1419
    %v1552 = vpop.f32.mrb[0].mxu0
    %v1553 = vadd.f32 0.0, %v1552
    %v1554 = vpop.f32.mrb[0].mxu0
    %1555 = vmatprep.mubr.f32.mxu0 0.0
    %1556 = vmatmul.mubr.f32.gmra.mrb[0].mxu0 %v1422
    %v1557 = vpop.f32.mrb[0].mxu0
    %v1558 = vadd.f32 0.0, %v1557
    %v1559 = vpop.f32.mrb[0].mxu0
    %1560 = vmatprep.mubr.f32.mxu0 0.0
    %1561 = vmatmul.mubr.f32.gmra.mrb[0].mxu0 %v1425
    %v1562 = vpop.f32.mrb[0].mxu0
    %v1563 = vadd.f32 0.0, %v1562
    %v1564 = vpop.f32.mrb[0].mxu0
    %1565 = vmatprep.mubr.f32.mxu0 0.0
    %1566 = vmatmul.mubr.f32.gmra.mrb[0].mxu0 %v1428
    %v1567 = vpop.f32.mrb[0].mxu0
    %v1568 = vadd.f32 0.0, %v1567
    %v1569 = vpop.f32.mrb[0].mxu0
    %1570 = vmatprep.mubr.f32.mxu0 0.0
    %1571 = vmatmul.mubr.f32.gmra.mrb[0].mxu0 %v1431
    %v1572 = vpop.f32.mrb[0].mxu0
    %v1573 = vadd.f32 0.0, %v1572
    %v1574 = vpop.f32.mrb[0].mxu0
    %1575 = vmatprep.mubr.f32.mxu0 0.0
    %1576 = vmatmul.mubr.f32.gmra.mrb[0].mxu0 %v1434
    %v1577 = vpop.f32.mrb[0].mxu0
    %v1578 = vadd.f32 0.0, %v1577
    %v1579 = vpop.f32.mrb[0].mxu0
    %1580 = vdwg.mxu0
    %v1581 = vadd.f32 %v1306, %v1503
    %v1582 = vadd.f32 %v1311, %v1508
    %v1583 = vadd.f32 %v1316, %v1513
    %v1584 = vadd.f32 %v1321, %v1518
    %v1585 = vadd.f32 %v1326, %v1523
    %v1586 = vadd.f32 %v1331, %v1528
    %v1587 = vadd.f32 %v1336, %v1533
    %v1588 = vadd.f32 %v1341, %v1538
    %v1589 = vadd.f32 %v1346, %v1543
    %v1590 = vadd.f32 %v1351, %v1548
    %v1591 = vadd.f32 %v1356, %v1553
    %v1592 = vadd.f32 %v1361, %v1558
    %v1593 = vadd.f32 %v1366, %v1563
    %v1594 = vadd.f32 %v1371, %v1568
    %v1595 = vadd.f32 %v1376, %v1573
    %v1596 = vadd.f32 %v1381, %v1578
    %1598 = vset.pattern.permute.xlu0 0
    %1599 = vperm.xlu0 %1598, %v106
    %v1600 = vpop.permute.xlu0 %1599
    %1603 = vset.pattern.permute.xlu0 0
    %1604 = vperm.xlu0 %1603, %v107
    %v1605 = vpop.permute.xlu0 %1604
    %1608 = vset.pattern.permute.xlu0 0
    %1609 = vperm.xlu0 %1608, %v108
    %v1610 = vpop.permute.xlu0 %1609
    %1613 = vset.pattern.permute.xlu0 0
    %1614 = vperm.xlu0 %1613, %v109
    %v1615 = vpop.permute.xlu0 %1614
    %1618 = vset.pattern.permute.xlu0 0
    %1619 = vperm.xlu0 %1618, %v110
    %v1620 = vpop.permute.xlu0 %1619
    %1623 = vset.pattern.permute.xlu0 0
    %1624 = vperm.xlu0 %1623, %v111
    %v1625 = vpop.permute.xlu0 %1624
    %1628 = vset.pattern.permute.xlu0 0
    %1629 = vperm.xlu0 %1628, %v112
    %v1630 = vpop.permute.xlu0 %1629
    %1633 = vset.pattern.permute.xlu0 0
    %1634 = vperm.xlu0 %1633, %v113
    %v1635 = vpop.permute.xlu0 %1634
    %1638 = vset.pattern.permute.xlu0 0
    %1639 = vperm.xlu0 %1638, %v114
    %v1640 = vpop.permute.xlu0 %1639
    %1643 = vset.pattern.permute.xlu0 0
    %1644 = vperm.xlu0 %1643, %v115
    %v1645 = vpop.permute.xlu0 %1644
    %1648 = vset.pattern.permute.xlu0 0
    %1649 = vperm.xlu0 %1648, %v116
    %v1650 = vpop.permute.xlu0 %1649
    %1653 = vset.pattern.permute.xlu0 0
    %1654 = vperm.xlu0 %1653, %v117
    %v1655 = vpop.permute.xlu0 %1654
    %1658 = vset.pattern.permute.xlu0 0
    %1659 = vperm.xlu0 %1658, %v118
    %v1660 = vpop.permute.xlu0 %1659
    %1663 = vset.pattern.permute.xlu0 0
    %1664 = vperm.xlu0 %1663, %v119
    %v1665 = vpop.permute.xlu0 %1664
    %1668 = vset.pattern.permute.xlu0 0
    %1669 = vperm.xlu0 %1668, %v120
    %v1670 = vpop.permute.xlu0 %1669
    %1673 = vset.pattern.permute.xlu0 0
    %1674 = vperm.xlu0 %1673, %v121
    %v1675 = vpop.permute.xlu0 %1674
    %v1677 = vmul.f32 %v1581, %v1600
    %v1678 = vmul.f32 %v1582, %v1605
    %v1679 = vmul.f32 %v1583, %v1610
    %v1680 = vmul.f32 %v1584, %v1615
    %v1681 = vmul.f32 %v1585, %v1620
    %v1682 = vmul.f32 %v1586, %v1625
    %v1683 = vmul.f32 %v1587, %v1630
    %v1684 = vmul.f32 %v1588, %v1635
    %v1685 = vmul.f32 %v1589, %v1640
    %v1686 = vmul.f32 %v1590, %v1645
    %v1687 = vmul.f32 %v1591, %v1650
    %v1688 = vmul.f32 %v1592, %v1655
    %v1689 = vmul.f32 %v1593, %v1660
    %v1690 = vmul.f32 %v1594, %v1665
    %v1691 = vmul.f32 %v1595, %v1670
    %v1692 = vmul.f32 %v1596, %v1675
    %v1693 = vadd.f32 %v1677, %v1678
    %v1694 = vrot.slane %v1693, 4
    %v1695 = vadd.f32 %v1693, %v1694
    %v1696 = vrot.slane %v1695, 2
    %v1697 = vadd.f32 %v1695, %v1696
    %v1698 = vrot.slane %v1697, 1
    %v1699 = vadd.f32 %v1697, %v1698
    %v1700 = vadd.f32 %v1679, %v1680
    %v1701 = vrot.slane %v1700, 4
    %v1702 = vadd.f32 %v1700, %v1701
    %v1703 = vrot.slane %v1702, 2
    %v1704 = vadd.f32 %v1702, %v1703
    %v1705 = vrot.slane %v1704, 1
    %v1706 = vadd.f32 %v1704, %v1705
    %v1707 = vadd.f32 %v1681, %v1682
    %v1708 = vrot.slane %v1707, 4
    %v1709 = vadd.f32 %v1707, %v1708
    %v1710 = vrot.slane %v1709, 2
    %v1711 = vadd.f32 %v1709, %v1710
    %v1712 = vrot.slane %v1711, 1
    %v1713 = vadd.f32 %v1711, %v1712
    %v1714 = vadd.f32 %v1683, %v1684
    %v1715 = vrot.slane %v1714, 4
    %v1716 = vadd.f32 %v1714, %v1715
    %v1717 = vrot.slane %v1716, 2
    %v1718 = vadd.f32 %v1716, %v1717
    %v1719 = vrot.slane %v1718, 1
    %v1720 = vadd.f32 %v1718, %v1719
    %v1721 = vadd.f32 %v1685, %v1686
    %v1722 = vrot.slane %v1721, 4
    %v1723 = vadd.f32 %v1721, %v1722
    %v1724 = vrot.slane %v1723, 2
    %v1725 = vadd.f32 %v1723, %v1724
    %v1726 = vrot.slane %v1725, 1
    %v1727 = vadd.f32 %v1725, %v1726
    %v1728 = vadd.f32 %v1687, %v1688
    %v1729 = vrot.slane %v1728, 4
    %v1730 = vadd.f32 %v1728, %v1729
    %v1731 = vrot.slane %v1730, 2
    %v1732 = vadd.f32 %v1730, %v1731
    %v1733 = vrot.slane %v1732, 1
    %v1734 = vadd.f32 %v1732, %v1733
    %v1735 = vadd.f32 %v1689, %v1690
    %v1736 = vrot.slane %v1735, 4
    %v1737 = vadd.f32 %v1735, %v1736
    %v1738 = vrot.slane %v1737, 2
    %v1739 = vadd.f32 %v1737, %v1738
    %v1740 = vrot.slane %v1739, 1
    %v1741 = vadd.f32 %v1739, %v1740
    %v1742 = vadd.f32 %v1691, %v1692
    %v1743 = vrot.slane %v1742, 4
    %v1744 = vadd.f32 %v1742, %v1743
    %v1745 = vrot.slane %v1744, 2
    %v1746 = vadd.f32 %v1744, %v1745
    %v1747 = vrot.slane %v1746, 1
    %v1748 = vadd.f32 %v1746, %v1747
    %v1749 = vld [vmem:[%s12] sm:$0x1]
    %v1751 = vlaneseq
    %v1752 = vshrl.u32 %v1751, 7
    %v1753 = vsub.s32 0, %v1752
    %v1754 = vrot.slane %v1749, %v1753
    %v1756 = vadd.f32 %v1699, %v1754
    %v1757 = vadd.f32 %v1706, %v1754
    %v1758 = vadd.f32 %v1713, %v1754
    %v1759 = vadd.f32 %v1720, %v1754
    %v1760 = vadd.f32 %v1727, %v1754
    %v1761 = vadd.f32 %v1734, %v1754
    %v1762 = vadd.f32 %v1741, %v1754
    %v1763 = vadd.f32 %v1748, %v1754
    %v1772 = vrot.slane %v1757, 7
    %vm1773 = vcmask 1041409
    %v1774 = vsel %vm1773, %v1772, %v1756
    %v1775 = vrot.slane %v1758, 6
    %vm1776 = vcmask 1042434
    %v1777 = vsel %vm1776, %v1775, %v1774
    %v1778 = vrot.slane %v1759, 5
    %vm1779 = vcmask 1043459
    %v1780 = vsel %vm1779, %v1778, %v1777
    %v1781 = vrot.slane %v1760, 4
    %vm1782 = vcmask 1044484
    %v1783 = vsel %vm1782, %v1781, %v1780
    %v1784 = vrot.slane %v1761, 3
    %vm1785 = vcmask 1045509
    %v1786 = vsel %vm1785, %v1784, %v1783
    %v1787 = vrot.slane %v1762, 2
    %vm1788 = vcmask 1046534
    %v1789 = vsel %vm1788, %v1787, %v1786
    %v1790 = vrot.slane %v1763, 1
    %vm1791 = vcmask 1047559
    %v1792 = vsel %vm1791, %v1790, %v1789
    %1794 = vmax.xlane.f32.xlu0 %v1792
    %v1795 = vpop.xlane.xlu0 %1794
    %v1797 = vrot.slane %v1795, 1
    %v1798 = vrot.slane %v1795, 2
    %v1799 = vrot.slane %v1795, 3
    %v1800 = vrot.slane %v1795, 4
    %v1801 = vrot.slane %v1795, 5
    %v1802 = vrot.slane %v1795, 6
    %v1803 = vrot.slane %v1795, 7
    %v1812 = vsub.f32 %v1756, %v1795
    %v1813 = vsub.f32 %v1757, %v1797
    %v1814 = vsub.f32 %v1758, %v1798
    %v1815 = vsub.f32 %v1759, %v1799
    %v1816 = vsub.f32 %v1760, %v1800
    %v1817 = vsub.f32 %v1761, %v1801
    %v1818 = vsub.f32 %v1762, %v1802
    %v1819 = vsub.f32 %v1763, %v1803
    %v1820 = vmul.f32 %v1812, 1.442695
    %v1821 = vpow.pop %v1820
    %v1822 = vmul.f32 %v1813, 1.442695
    %v1823 = vpow.pop %v1822
    %v1824 = vmul.f32 %v1814, 1.442695
    %v1825 = vpow.pop %v1824
    %v1826 = vmul.f32 %v1815, 1.442695
    %v1827 = vpow.pop %v1826
    %v1828 = vmul.f32 %v1816, 1.442695
    %v1829 = vpow.pop %v1828
    %v1830 = vmul.f32 %v1817, 1.442695
    %v1831 = vpow.pop %v1830
    %v1832 = vmul.f32 %v1818, 1.442695
    %v1833 = vpow.pop %v1832
    %v1834 = vmul.f32 %v1819, 1.442695
    %v1835 = vpow.pop %v1834
    %v1844 = vrot.slane %v1823, 7
    %v1845 = vsel %vm1773, %v1844, %v1821
    %v1846 = vrot.slane %v1825, 6
    %v1847 = vsel %vm1776, %v1846, %v1845
    %v1848 = vrot.slane %v1827, 5
    %v1849 = vsel %vm1779, %v1848, %v1847
    %v1850 = vrot.slane %v1829, 4
    %v1851 = vsel %vm1782, %v1850, %v1849
    %v1852 = vrot.slane %v1831, 3
    %v1853 = vsel %vm1785, %v1852, %v1851
    %v1854 = vrot.slane %v1833, 2
    %v1855 = vsel %vm1788, %v1854, %v1853
    %v1856 = vrot.slane %v1835, 1
    %v1857 = vsel %vm1791, %v1856, %v1855
    %1859 = vadd.xlane.f32.xlu0 %v1857
    %v1860 = vpop.xlane.xlu0 %1859
    %v1861 = vlog2.pop %v1860
    %v1862 = vmul.f32 %v1861, 0.6931472
    %v1864 = vrot.slane %v1862, 1
    %v1865 = vrot.slane %v1862, 2
    %v1866 = vrot.slane %v1862, 3
    %v1867 = vrot.slane %v1862, 4
    %v1868 = vrot.slane %v1862, 5
    %v1869 = vrot.slane %v1862, 6
    %v1870 = vrot.slane %v1862, 7
    %v1879 = vsub.f32 %v1812, %v1862
    %v1880 = vsub.f32 %v1813, %v1864
    %v1881 = vsub.f32 %v1814, %v1865
    %v1882 = vsub.f32 %v1815, %v1866
    %v1883 = vsub.f32 %v1816, %v1867
    %v1884 = vsub.f32 %v1817, %v1868
    %v1885 = vsub.f32 %v1818, %v1869
    %v1886 = vsub.f32 %v1819, %v1870
    %v1895 = vrot.slane %v1880, 7
    %v1896 = vsel %vm1773, %v1895, %v1879
    %v1897 = vrot.slane %v1881, 6
    %v1898 = vsel %vm1776, %v1897, %v1896
    %v1899 = vrot.slane %v1882, 5
    %v1900 = vsel %vm1779, %v1899, %v1898
    %v1901 = vrot.slane %v1883, 4
    %v1902 = vsel %vm1782, %v1901, %v1900
    %v1903 = vrot.slane %v1884, 3
    %v1904 = vsel %vm1785, %v1903, %v1902
    %v1905 = vrot.slane %v1885, 2
    %v1906 = vsel %vm1788, %v1905, %v1904
    %v1907 = vrot.slane %v1886, 1
    %v1908 = vsel %vm1791, %v1907, %v1906
    %1910 = vst [vmem:[%s13] sm:$0xff] %v1908
    // Predicated region
    $region58: #{graphsnn_forward.1} parent=1 // pred_check
      _
    $region59: #{graphsnn_forward.1} parent=1 // pred_check_branch
      %1912 = sbr.rel (0) target = $region61
    $region60: #{graphsnn_forward.1} parent=1 // pred_region
      _
    $region61: #{graphsnn_forward.1} parent=1 // pred_fallthru
      _
    // Predicated region
    $region62: #{graphsnn_forward.1} parent=1 // pred_check
      _
    $region63: #{graphsnn_forward.1} parent=1 // pred_check_branch
      %1914 = sbr.rel (0) target = $region65
    $region64: #{graphsnn_forward.1} parent=1 // pred_region
      _
    $region65: #{graphsnn_forward.1} parent=1 // pred_fallthru
      _
    %1915 = vsyncpa [#allocation3], 1

</llo_original>
